<compile_context>
chip_gen: v6e
topology: v6e:2x2x1
jax: 0.10.0
libtpu: 0.0.40
codegen_flags: <defaults>
</compile_context>

<pallas_src>
import functools

import jax
import jax.numpy as jnp
from jax.experimental import pallas as pl
from jax.experimental.pallas import tpu as pltpu

# ---------------- configuration (consistent with the module) -----------------
R = 8                            # representation_size
NUM_EMBEDDINGS = [10, 20, 30]    # vocab sizes for sparse features
E = 4                            # embedding_dim
N_DENSE = 4                      # len(dense_features)
N_SPARSE = len(NUM_EMBEDDINGS)   # len(sparse_features)
H1, H2 = 32, 16                  # hidden_units (before input-dim insert)

D_DENSE_IN = N_DENSE + R                  # fm_1st_order_dense input dim = 12
D_DNN_IN = N_SPARSE * E + D_DENSE_IN      # DNN input dim = 24
D_IN = D_DNN_IN + 1                       # activation slab width (+fm1_sparse)

# packed weight slab geometry
W_ROWS = max(D_DNN_IN, H1, H2) + 1        # 33 (last row = biases)
W_COLS = (H1 + 1) + H2 + 1                # 50
BIAS_ROW = W_ROWS - 1


# ---------------- Pallas kernel ----------------------------------------------
def decoder_kernel(x_ref, w_ref, out_ref):
    x = x_ref[...]                                  # [TB, D_IN]  (f32)
    wv = w_ref[...]                                 # [W_ROWS, W_COLS]

    dnn_in = x[:, :D_DNN_IN]                        # [TB, 24]
    fm1_sparse = x[:, D_DNN_IN:D_DNN_IN + 1]        # [TB, 1]
    fm2_flat = x[:, :N_SPARSE * E]                  # [TB, S*E], k = s*E + e

    # ---- FM second order: field reductions as matmuls on the (idle) MXU ----
    # M[k, e] = 1 iff (k % E) == e  -> fm2_flat @ M == sum over fields.
    k_idx = jax.lax.broadcasted_iota(jnp.int32, (N_SPARSE * E, E), 0) % E
    e_idx = jax.lax.broadcasted_iota(jnp.int32, (N_SPARSE * E, E), 1)
    field_sum_m = (k_idx == e_idx).astype(jnp.float32)          # [S*E, E]
    ones_e = jnp.ones((E, 1), jnp.float32)                      # [E, 1]

    sum_embed = jnp.dot(fm2_flat, field_sum_m,
                        preferred_element_type=jnp.float32)     # [TB, E]
    sum_square_embed = jnp.dot(fm2_flat * fm2_flat, field_sum_m,
                               preferred_element_type=jnp.float32)
    sub = 0.5 * (sum_embed * sum_embed - sum_square_embed)      # [TB, E]
    fm2_part = jnp.dot(sub, ones_e,
                       preferred_element_type=jnp.float32)      # [TB, 1]

    # ---- fused layer 0: DNN Linear(24->32) + FM 1st-order dense Linear ----
    w0p = wv[:D_DNN_IN, :H1 + 1]                                # [24, 33]
    b0p = wv[BIAS_ROW:BIAS_ROW + 1, :H1 + 1]                    # [1, 33]
    h0 = jnp.dot(dnn_in, w0p, preferred_element_type=jnp.float32) + b0p
    fm1_dense = h0[:, H1:H1 + 1]                                # [TB, 1] (pre-ReLU)
    h = jnp.maximum(h0[:, :H1], 0.0)                            # [TB, H1]

    # ---- DNN layer 1: Linear(32->16) + ReLU ----
    w1 = wv[:H1, H1 + 1:H1 + 1 + H2]
    b1 = wv[BIAS_ROW:BIAS_ROW + 1, H1 + 1:H1 + 1 + H2]
    h = jnp.maximum(jnp.dot(h, w1, preferred_element_type=jnp.float32) + b1, 0.0)

    # ---- final_linear: Linear(16->1) ----
    wf = wv[:H2, H1 + 1 + H2:W_COLS]
    bf = wv[BIAS_ROW:BIAS_ROW + 1, H1 + 1 + H2:W_COLS]
    dnn_out = jnp.dot(h, wf, preferred_element_type=jnp.float32) + bf

    out_ref[...] = fm1_sparse + fm1_dense + fm2_part + dnn_out  # [TB, 1]


# ---------------- weight/bias slab packing ------------------------------------
def pack_weight_slab(params):
    slab = jnp.zeros((W_ROWS, W_COLS), jnp.float32)
    # fused layer 0: [w0 | wd zero-padded to D_DNN_IN rows]
    slab = slab.at[:D_DNN_IN, :H1].set(params["w0"])
    slab = slab.at[N_SPARSE * E:D_DNN_IN, H1].set(params["wd"][:, 0])
    slab = slab.at[BIAS_ROW, :H1].set(params["b0"][0])
    slab = slab.at[BIAS_ROW, H1].set(params["bd"][0, 0])
    # DNN layer 1
    slab = slab.at[:H1, H1 + 1:H1 + 1 + H2].set(params["w1"])
    slab = slab.at[BIAS_ROW, H1 + 1:H1 + 1 + H2].set(params["b1"][0])
    # final linear
    slab = slab.at[:H2, H1 + 1 + H2].set(params["wf"][:, 0])
    slab = slab.at[BIAS_ROW, H1 + 1 + H2].set(params["bf"][0, 0])
    return slab


# ---------------- wrapper -----------------------------------------------------
@functools.partial(jax.jit, static_argnames=("tb",))
def deterministic_decoder(representation, target_x, params, *, tb=128):
    batch = representation.shape[0]

    # Split target_x into dense / sparse parts (PyTorch: .long() on sparse ids).
    dense_raw = target_x[:, :N_DENSE]
    sparse_idx = target_x[:, N_DENSE:].astype(jnp.int32)           # [B, S]

    # dense_input = cat([dense, representation], -1)
    dense_input = jnp.concatenate([dense_raw, representation], axis=-1)  # [B, 12]

    # Tiny embedding gathers (layout plumbing, tables are <=30 rows each).
    fm1_sparse = jnp.zeros((batch, 1), jnp.float32)
    fm2_fields = []
    for i in range(N_SPARSE):
        idx = jnp.clip(sparse_idx[:, i], 0, NUM_EMBEDDINGS[i] - 1)  # guard OOR ids
        fm1_sparse = fm1_sparse + jnp.take(params["emb1"][i], idx, axis=0)
        fm2_fields.append(jnp.take(params["emb2"][i], idx, axis=0))
    fm2_flat = jnp.concatenate(fm2_fields, axis=-1)                 # [B, S*E]

    # Single activation slab: [flatten(fm2) | dense_input | fm1_sparse_sum]
    x = jnp.concatenate([fm2_flat, dense_input, fm1_sparse], axis=-1)  # [B, 25]

    # Packed weight slab (one constant-index DMA).
    w_slab = pack_weight_slab(params)

    # Batch tiling: TB rows per tile (multiple of 8), pad up, slice back.
    tb = max(8, min(int(tb), 2048))
    padded = pl.cdiv(batch, tb) * tb
    if padded != batch:
        x = jnp.pad(x, ((0, padded - batch), (0, 0)))
    grid = (padded // tb,)

    out = pl.pallas_call(
        decoder_kernel,
        out_shape=jax.ShapeDtypeStruct((padded, 1), jnp.float32),
        grid=grid,
        in_specs=[
            pl.BlockSpec((tb, D_IN), lambda i: (i, 0)),
            pl.BlockSpec((W_ROWS, W_COLS), lambda i: (0, 0)),
        ],
        out_specs=pl.BlockSpec((tb, 1), lambda i: (i, 0)),
        compiler_params=pltpu.CompilerParams(
            dimension_semantics=("parallel",)),
    )(x, w_slab)
    return out[:batch]


# ---------------- pure-JAX reference (for correctness check) ------------------
def decoder_reference(representation, target_x, params):
    batch = representation.shape[0]
    dense_raw = target_x[:, :N_DENSE]
    sparse_idx = target_x[:, N_DENSE:].astype(jnp.int32)
    dense_input = jnp.concatenate([dense_raw, representation], axis=-1)

    fm1_sparse = jnp.zeros((batch, 1), jnp.float32)
    fm2_fields = []
    for i in range(N_SPARSE):
        idx = jnp.clip(sparse_idx[:, i], 0, NUM_EMBEDDINGS[i] - 1)
        fm1_sparse = fm1_sparse + jnp.take(params["emb1"][i], idx, axis=0)
        fm2_fields.append(jnp.take(params["emb2"][i], idx, axis=0))
    fm2 = jnp.stack(fm2_fields, axis=1)                           # [B, S, E]

    fm1_dense = dense_input @ params["wd"] + params["bd"]
    fm1_part = fm1_sparse + fm1_dense

    sum_embed = jnp.sum(fm2, axis=1)
    fm2_part = 0.5 * jnp.sum(sum_embed * sum_embed - jnp.sum(fm2 * fm2, axis=1),
                             axis=1, keepdims=True)

    dnn_in = jnp.concatenate([fm2.reshape(batch, N_SPARSE * E), dense_input], -1)
    h = jnp.maximum(dnn_in @ params["w0"] + params["b0"], 0.0)
    h = jnp.maximum(h @ params["w1"] + params["b1"], 0.0)
    dnn_out = h @ params["wf"] + params["bf"]
    return fm1_part + fm2_part + dnn_out


# ---------------- deterministic parameter init --------------------------------
def init_params(key):
    keys = jax.random.split(key, 16)
    s = 0.1
    emb1 = [s * jax.random.normal(keys[i], (v, 1), jnp.float32)
            for i, v in enumerate(NUM_EMBEDDINGS)]
    emb2 = [s * jax.random.normal(keys[3 + i], (v, E), jnp.float32)
            for i, v in enumerate(NUM_EMBEDDINGS)]
    return {
        "emb1": emb1,
        "emb2": emb2,
        # fm_1st_order_dense: Linear(D_DENSE_IN, 1), weights stored transposed
        "wd": s * jax.random.normal(keys[6], (D_DENSE_IN, 1), jnp.float32),
        "bd": s * jax.random.normal(keys[7], (1, 1), jnp.float32),
        # Dnn: Linear(D_DNN_IN, H1) -> ReLU -> Linear(H1, H2) -> ReLU
        "w0": s * jax.random.normal(keys[8], (D_DNN_IN, H1), jnp.float32),
        "b0": s * jax.random.normal(keys[9], (1, H1), jnp.float32),
        "w1": s * jax.random.normal(keys[10], (H1, H2), jnp.float32),
        "b1": s * jax.random.normal(keys[11], (1, H2), jnp.float32),
        # final_linear: Linear(H2, 1)
        "wf": s * jax.random.normal(keys[12], (H2, 1), jnp.float32),
        "bf": s * jax.random.normal(keys[13], (1, 1), jnp.float32),
    }


if __name__ == "__main__":
    B = 256   # small, but gives a 2-tile parallel grid at TB=128

    key = jax.random.PRNGKey(0)
    k_rep, k_dense, k_sparse, k_params = jax.random.split(key, 4)

    params = init_params(k_params)

    representation = jax.random.normal(k_rep, (B, R), jnp.float32)
    dense_part = jax.random.normal(k_dense, (B, N_DENSE), jnp.float32)
    # sparse part: integer category ids stored as floats (as in target_x)
    sparse_part = jnp.stack(
        [jax.random.randint(jax.random.fold_in(k_sparse, i), (B,), 0, v).astype(jnp.float32)
         for i, v in enumerate(NUM_EMBEDDINGS)], axis=1)
    target_x = jnp.concatenate([dense_part, sparse_part], axis=-1)  # [B, N_DENSE+N_SPARSE]

    out = deterministic_decoder(representation, target_x, params, tb=128)
    out = jax.block_until_ready(out)
    assert out.shape == (B, 1)

    ref = decoder_reference(representation, target_x, params)
    assert jnp.allclose(out, ref, atol=2e-3, rtol=2e-3), (
        float(jnp.max(jnp.abs(out - ref))))

    print("KERNEL_OK")
</pallas_src>

<mosaic_0001>
module attributes {stable_mosaic.version = 11 : i64} {
  func.func @decoder_kernel(%arg0: i32, %arg1: memref<128x25xf32, #tpu.memory_space<vmem>>, %arg2: memref<33x50xf32, #tpu.memory_space<vmem>>, %arg3: memref<128x1xf32, #tpu.memory_space<vmem>>) attributes {dimension_semantics = [#tpu.dimension_semantics<parallel>], iteration_bounds = array<i64: 2>, scalar_prefetch = 0 : i64, scratch_operands = 0 : i64, tpu.core_type = #tpu.core_type<tc>, window_params = [{transform_indices = @transform_0, window_bounds = array<i64: 128, 25>}, {pipeline_mode = #tpu.pipeline_mode<synchronous>, transform_indices = @transform_1, window_bounds = array<i64: 33, 50>}, {transform_indices = @transform_2, window_bounds = array<i64: 128, 1>}]} {
    %c0 = arith.constant 0 : index
    %c0_0 = arith.constant 0 : index
    %0 = vector.load %arg1[%c0, %c0_0] : memref<128x25xf32, #tpu.memory_space<vmem>>, vector<128x25xf32>
    %c0_1 = arith.constant 0 : index
    %c0_2 = arith.constant 0 : index
    %1 = vector.load %arg2[%c0_1, %c0_2] : memref<33x50xf32, #tpu.memory_space<vmem>>, vector<33x50xf32>
    %2 = vector.extract_strided_slice %0 {offsets = [0, 0], sizes = [128, 24], strides = [1, 1]} : vector<128x25xf32> to vector<128x24xf32>
    %3 = vector.extract_strided_slice %0 {offsets = [0, 24], sizes = [128, 1], strides = [1, 1]} : vector<128x25xf32> to vector<128x1xf32>
    %4 = vector.extract_strided_slice %0 {offsets = [0, 0], sizes = [128, 12], strides = [1, 1]} : vector<128x25xf32> to vector<128x12xf32>
    %5 = tpu.iota {dimensions = array<i32: 0>} : vector<12x4xi32>
    %c4_i32 = arith.constant 4 : i32
    %c0_i32 = arith.constant 0 : i32
    %6 = arith.cmpi eq, %c4_i32, %c0_i32 : i32
    %c1_i32 = arith.constant 1 : i32
    %7 = arith.select %6, %c1_i32, %c4_i32 : i32
    %8 = vector.broadcast %7 : i32 to vector<12x4xi32>
    %9 = arith.remsi %5, %8 : vector<12x4xi32>
    %c0_i32_3 = arith.constant 0 : i32
    %10 = vector.broadcast %c0_i32_3 : i32 to vector<12x4xi32>
    %11 = arith.cmpi ne, %9, %10 : vector<12x4xi32>
    %c0_i32_4 = arith.constant 0 : i32
    %12 = vector.broadcast %c0_i32_4 : i32 to vector<12x4xi32>
    %13 = arith.cmpi slt, %9, %12 : vector<12x4xi32>
    %c0_i32_5 = arith.constant 0 : i32
    %14 = arith.cmpi slt, %7, %c0_i32_5 : i32
    %15 = vector.broadcast %14 : i1 to vector<12x4xi1>
    %16 = vector.broadcast %15 : vector<12x4xi1> to vector<12x4xi1>
    %17 = arith.xori %13, %16 : vector<12x4xi1>
    %18 = arith.andi %17, %11 : vector<12x4xi1>
    %19 = vector.broadcast %7 : i32 to vector<12x4xi32>
    %20 = arith.addi %9, %19 : vector<12x4xi32>
    %21 = arith.select %18, %20, %9 : vector<12x4xi1>, vector<12x4xi32>
    %22 = tpu.iota {dimensions = array<i32: 1>} : vector<12x4xi32>
    %23 = arith.cmpi eq, %21, %22 : vector<12x4xi32>
    %24 = arith.extui %23 : vector<12x4xi1> to vector<12x4xi32>
    %25 = arith.sitofp %24 : vector<12x4xi32> to vector<12x4xf32>
    %cst = arith.constant 1.000000e+00 : f32
    %26 = vector.broadcast %cst : f32 to vector<4x1xf32>
    %cst_6 = arith.constant dense<0.000000e+00> : vector<128x4xf32>
    %27 = tpu.matmul %4, %25, %cst_6 {dimension_numbers = #tpu.dot_dimension_numbers<[1], [0], [0], [1], [0, 0, 1, 1], [], []>} : vector<128x12xf32>, vector<12x4xf32>, vector<128x4xf32> -> vector<128x4xf32>
    %28 = arith.mulf %4, %4 : vector<128x12xf32>
    %cst_7 = arith.constant dense<0.000000e+00> : vector<128x4xf32>
    %29 = tpu.matmul %28, %25, %cst_7 {dimension_numbers = #tpu.dot_dimension_numbers<[1], [0], [0], [1], [0, 0, 1, 1], [], []>} : vector<128x12xf32>, vector<12x4xf32>, vector<128x4xf32> -> vector<128x4xf32>
    %30 = arith.mulf %27, %27 : vector<128x4xf32>
    %31 = arith.subf %30, %29 : vector<128x4xf32>
    %cst_8 = arith.constant 5.000000e-01 : f32
    %32 = vector.broadcast %cst_8 : f32 to vector<128x4xf32>
    %33 = arith.mulf %32, %31 : vector<128x4xf32>
    %cst_9 = arith.constant dense<0.000000e+00> : vector<128x1xf32>
    %34 = tpu.matmul %33, %26, %cst_9 {dimension_numbers = #tpu.dot_dimension_numbers<[1], [0], [0], [1], [0, 0, 1, 1], [], []>} : vector<128x4xf32>, vector<4x1xf32>, vector<128x1xf32> -> vector<128x1xf32>
    %35 = vector.extract_strided_slice %1 {offsets = [0, 0], sizes = [24, 33], strides = [1, 1]} : vector<33x50xf32> to vector<24x33xf32>
    %36 = vector.extract_strided_slice %1 {offsets = [32, 0], sizes = [1, 33], strides = [1, 1]} : vector<33x50xf32> to vector<1x33xf32>
    %cst_10 = arith.constant dense<0.000000e+00> : vector<128x33xf32>
    %37 = tpu.matmul %2, %35, %cst_10 {dimension_numbers = #tpu.dot_dimension_numbers<[1], [0], [0], [1], [0, 0, 1, 1], [], []>} : vector<128x24xf32>, vector<24x33xf32>, vector<128x33xf32> -> vector<128x33xf32>
    %38 = vector.broadcast %36 : vector<1x33xf32> to vector<128x33xf32>
    %39 = arith.addf %37, %38 : vector<128x33xf32>
    %40 = vector.extract_strided_slice %39 {offsets = [0, 32], sizes = [128, 1], strides = [1, 1]} : vector<128x33xf32> to vector<128x1xf32>
    %41 = vector.extract_strided_slice %39 {offsets = [0, 0], sizes = [128, 32], strides = [1, 1]} : vector<128x33xf32> to vector<128x32xf32>
    %cst_11 = arith.constant 0.000000e+00 : f32
    %42 = vector.broadcast %cst_11 : f32 to vector<128x32xf32>
    %43 = arith.maximumf %41, %42 : vector<128x32xf32>
    %44 = vector.extract_strided_slice %1 {offsets = [0, 33], sizes = [32, 16], strides = [1, 1]} : vector<33x50xf32> to vector<32x16xf32>
    %45 = vector.extract_strided_slice %1 {offsets = [32, 33], sizes = [1, 16], strides = [1, 1]} : vector<33x50xf32> to vector<1x16xf32>
    %cst_12 = arith.constant dense<0.000000e+00> : vector<128x16xf32>
    %46 = tpu.matmul %43, %44, %cst_12 {dimension_numbers = #tpu.dot_dimension_numbers<[1], [0], [0], [1], [0, 0, 1, 1], [], []>} : vector<128x32xf32>, vector<32x16xf32>, vector<128x16xf32> -> vector<128x16xf32>
    %47 = vector.broadcast %45 : vector<1x16xf32> to vector<128x16xf32>
    %48 = arith.addf %46, %47 : vector<128x16xf32>
    %cst_13 = arith.constant 0.000000e+00 : f32
    %49 = vector.broadcast %cst_13 : f32 to vector<128x16xf32>
    %50 = arith.maximumf %48, %49 : vector<128x16xf32>
    %51 = vector.extract_strided_slice %1 {offsets = [0, 49], sizes = [16, 1], strides = [1, 1]} : vector<33x50xf32> to vector<16x1xf32>
    %52 = vector.extract_strided_slice %1 {offsets = [32, 49], sizes = [1, 1], strides = [1, 1]} : vector<33x50xf32> to vector<1x1xf32>
    %cst_14 = arith.constant dense<0.000000e+00> : vector<128x1xf32>
    %53 = tpu.matmul %50, %51, %cst_14 {dimension_numbers = #tpu.dot_dimension_numbers<[1], [0], [0], [1], [0, 0, 1, 1], [], []>} : vector<128x16xf32>, vector<16x1xf32>, vector<128x1xf32> -> vector<128x1xf32>
    %54 = vector.broadcast %52 : vector<1x1xf32> to vector<128x1xf32>
    %55 = arith.addf %53, %54 : vector<128x1xf32>
    %56 = arith.addf %3, %40 : vector<128x1xf32>
    %57 = arith.addf %56, %34 : vector<128x1xf32>
    %58 = arith.addf %57, %55 : vector<128x1xf32>
    %c0_15 = arith.constant 0 : index
    %c0_16 = arith.constant 0 : index
    %59 = vector.load %arg3[%c0_15, %c0_16] : memref<128x1xf32, #tpu.memory_space<vmem>>, vector<128x1xf32>
    tpu.vector_store %arg3[%c0_15, %c0_16], %58 {strides = array<i32>} : memref<128x1xf32, #tpu.memory_space<vmem>>, vector<128x1xf32>,
    return
  }
  func.func @transform_0(%arg0: i32) -> (i32, i32) {
    %c0_i32 = arith.constant 0 : i32
    %c0_i32_0 = arith.constant 0 : i32
    return %arg0, %c0_i32 : i32, i32
  }
  func.func @transform_1(%arg0: i32) -> (i32, i32) {
    %c0_i32 = arith.constant 0 : i32
    %c0_i32_0 = arith.constant 0 : i32
    %c0_i32_1 = arith.constant 0 : i32
    return %c0_i32, %c0_i32_0 : i32, i32
  }
  func.func @transform_2(%arg0: i32) -> (i32, i32) {
    %c0_i32 = arith.constant 0 : i32
    %c0_i32_0 = arith.constant 0 : i32
    return %arg0, %c0_i32 : i32, i32
  }
}

</mosaic_0001>

<llo_original>
// kernel: deterministic_decoder.1
$region0: #{deterministic_decoder.1}
  #allocation0 [shape = 'u32[]', space=smem, size = 0x4, offset = 0x4, fixed_abs, tag = 'smem constant byte address 0x4 - core index']
  #allocation1 [shape = 'u32[144,128]{1,0:T(1,128)}', space=vmem, size = 0x12000, scoped, tag = 'internal scratch']
  %s0 = inlined_call_operand.vmem [shape: f32[256,25], index: 0, kind: input, shape index: {}]
  %s1 = inlined_call_operand.vmem [shape: f32[33,50], index: 1, kind: input, shape index: {}]
  %s2 = inlined_call_operand.vmem [shape: f32[256,1], index: 2, kind: output, shape index: {}]
  %s3 = sld [smem:[#allocation0]]
  $region41: #{deterministic_decoder.1} parent=0
    _
  %s5 = ssub.s32 1, %s3
  %s6 = scalar_select 0, %s5, %s3
  loop: start=0, step=1, limit=4
  $region2: #{deterministic_decoder.1} parent=0 // loop_pre_header
    _
  $region3: #{deterministic_decoder.1} parent=0 // loop_header
    %s8 = sphi 0, %s12
    %p9 = scmp.ge.s32.totalorder %s8, 4
    %s18 = sphi 0, %s20
    %s21 = sphi 0, %s18
    %s22 = sphi 0, %s21
    %s38 = sphi 0, %s22
    %s42 = sphi 0, %s42
    %s44 = sphi 0, %s42
    %s45 = sphi 0, %s44
    %s59 = sphi 0, %s45
    %s65 = sphi 0, %s67
    %s68 = sphi 0, %s65
    %s69 = sphi 0, %s68
    %s85 = sphi 0, %s69
  $region4: #{deterministic_decoder.1} parent=0 // loop_header_branch
    %11 = sbr.rel (%p9) target = $region8
  $region5: #{deterministic_decoder.1} parent=0 // loop_body
    %s13 = ssub.s32 %s8, 1
    %s14 = ssub.s32 %s8, 2
    %s15 = sadd.s32 %s8, 1
    %s16 = ssub.s32 %s8, %s15
    %p17 = scmp.eq.s32.totalorder %s16, 0
    %s19 = sadd.s32 %s18, 1
    %s20 = scalar_select %p17, %s18, %s19
    %p23 = pneg %p17
    %p24 = scmp.eq.s32.totalorder %s8, 1
    %p25 = por %p23, %p24
    %p26 = scmp.ne.s32.totalorder %s18, %s21
    %p27 = scmp.eq.s32.totalorder %s8, 0
    %p28 = por %p26, %p27
    %p29 = scmp.ne.s32.totalorder %s18, %s21
    %p30 = scmp.eq.s32.totalorder %s13, 1
    %p31 = por %p29, %p30
    %p32 = scmp.ne.s32.totalorder %s21, %s22
    %p33 = scmp.eq.s32.totalorder %s13, 0
    %p34 = por %p32, %p33
    %p35 = scmp.ne.s32.totalorder %s21, %s22
    %p36 = scmp.eq.s32.totalorder %s14, 1
    %p37 = por %p35, %p36
    %p39 = scmp.ne.s32.totalorder %s22, %s38
    %p40 = scmp.eq.s32.totalorder %s14, 0
    %p41 = por %p39, %p40
    %s43 = sadd.s32 %s42, 1
    %p46 = scmp.eq.s32.totalorder %s8, 1
    %p47 = scmp.ne.s32.totalorder %s42, %s44
    %p48 = scmp.eq.s32.totalorder %s8, 0
    %p49 = por %p47, %p48
    %p50 = scmp.ne.s32.totalorder %s42, %s44
    %p51 = scmp.eq.s32.totalorder %s13, 1
    %p52 = por %p50, %p51
    %p53 = scmp.ne.s32.totalorder %s44, %s45
    %p54 = scmp.eq.s32.totalorder %s13, 0
    %p55 = por %p53, %p54
    %p56 = scmp.ne.s32.totalorder %s44, %s45
    %p57 = scmp.eq.s32.totalorder %s14, 1
    %p58 = por %p56, %p57
    %p60 = scmp.ne.s32.totalorder %s45, %s59
    %p61 = scmp.eq.s32.totalorder %s14, 0
    %p62 = por %p60, %p61
    %s63 = ssub.s32 %s8, %s15
    %p64 = scmp.eq.s32.totalorder %s63, 0
    %s66 = sadd.s32 %s65, 1
    %s67 = scalar_select %p64, %s65, %s66
    %p70 = pneg %p64
    %p71 = scmp.eq.s32.totalorder %s8, 1
    %p72 = por %p70, %p71
    %p73 = scmp.ne.s32.totalorder %s65, %s68
    %p74 = scmp.eq.s32.totalorder %s8, 0
    %p75 = por %p73, %p74
    %p76 = scmp.ne.s32.totalorder %s65, %s68
    %p77 = scmp.eq.s32.totalorder %s13, 1
    %p78 = por %p76, %p77
    %p79 = scmp.ne.s32.totalorder %s68, %s69
    %p80 = scmp.eq.s32.totalorder %s13, 0
    %p81 = por %p79, %p80
    %p82 = scmp.ne.s32.totalorder %s68, %s69
    %p83 = scmp.eq.s32.totalorder %s14, 1
    %p84 = por %p82, %p83
    %p86 = scmp.ne.s32.totalorder %s69, %s85
    %p87 = scmp.eq.s32.totalorder %s14, 0
    %p88 = por %p86, %p87
    %p89 = scmp.le.s32.totalorder 1, %s8
    %p90 = scmp.lt.s32.totalorder %s8, 3
    %p91 = pnand %p89, %p90
    %p92 = pneg %p91
    // Predicated region
    $region9: #{deterministic_decoder.1} parent=5 // pred_check
      _
    $region10: #{deterministic_decoder.1} parent=5 // pred_check_branch
      %94 = sbr.rel (%p91) target = $region12
    $region11: #{deterministic_decoder.1} parent=5 // pred_region
      %s95 = ssub.s32 %s8, 1
      // Predicated region
      $region13: #{deterministic_decoder.1} parent=11 // pred_check
        %p96 = pneg %p55
      $region14: #{deterministic_decoder.1} parent=11 // pred_check_branch
        %98 = sbr.rel (%p96) target = $region16
      $region15: #{deterministic_decoder.1} parent=11 // pred_region
        _
      $region16: #{deterministic_decoder.1} parent=11 // pred_fallthru
        _
    $region12: #{deterministic_decoder.1} parent=5 // pred_fallthru
      _
    %p99 = scmp.lt.s32.totalorder %s8, 2
    // Predicated region
    $region17: #{deterministic_decoder.1} parent=5 // pred_check
      %p100 = pneg %p99
    $region18: #{deterministic_decoder.1} parent=5 // pred_check_branch
      %102 = sbr.rel (%p100) target = $region20
    $region19: #{deterministic_decoder.1} parent=5 // pred_region
      // Predicated region
      $region21: #{deterministic_decoder.1} parent=19 // pred_check
        %p103 = pneg %p28
      $region22: #{deterministic_decoder.1} parent=19 // pred_check_branch
        %105 = sbr.rel (%p103) target = $region24
      $region23: #{deterministic_decoder.1} parent=19 // pred_region
        %s106 = smul.u32 16, %s8
        %p107 = scmp.lt.s32.totalorder %s106, 31
        %s108 = scalar_select %p107, %s106, 31
        %s109 = smul.addr %s108, 8
        %s110 = scalar_lea.vmem %s0, %s109
        %s111 = smul.u32 16, %s8
      $region24: #{deterministic_decoder.1} parent=19 // pred_fallthru
        _
    $region20: #{deterministic_decoder.1} parent=5 // pred_fallthru
      _
    %p112 = scmp.le.s32.totalorder 1, %s8
    %p113 = scmp.lt.s32.totalorder %s8, 3
    %p114 = pnand %p112, %p113
    %p115 = pneg %p114
    // Predicated region
    $region25: #{deterministic_decoder.1} parent=5 // pred_check
      _
    $region26: #{deterministic_decoder.1} parent=5 // pred_check_branch
      %117 = sbr.rel (%p114) target = $region28
    $region27: #{deterministic_decoder.1} parent=5 // pred_region
      %s118 = ssub.s32 %s8, 1
      %s119 = smul.u32 16, %s13
      %p120 = scmp.lt.s32.totalorder %s119, 31
      %s121 = scalar_select %p120, %s119, 31
      %s122 = smul.addr %s121, 8
      %s123 = scalar_lea.vmem %s0, %s122
      %p124 = pneg %p34
      %p125 = pneg %p31
      %p126 = pneg %p55
      %p127 = pneg %p52
      %p128 = pneg %p81
      %p129 = pneg %p78
      %s130 = smul.u32 16, %s13
      %p131 = scmp.lt.s32.totalorder %s130, 31
      %s132 = scalar_select %p131, %s130, 31
      %s133 = smul.addr %s132, 8
      %s134 = scalar_lea.vmem %s2, %s133
      %s135 = smul.u32 16, %s13
      %p136 = scmp.lt.s32.totalorder %s135, 31
      %s137 = scalar_select %p136, %s135, 31
      %s138 = smul.addr %s137, 8
      %s139 = scalar_lea.vmem %s0, %s138
      %s140 = smul.u32 16, %s13
      %s141 = smul.u32 16, %s13
      %p142 = scmp.lt.s32.totalorder %s141, 31
      %s143 = scalar_select %p142, %s141, 31
      %s144 = smul.addr %s143, 8
      %s145 = scalar_lea.vmem %s2, %s144
      %s146 = smul.u32 16, %s13
      %v147 = vld [vmem:[%s139] sm:$0xff]
      %v148 = vld [vmem:[%s139 + $0x8] sm:$0xff]
      %v149 = vld [vmem:[%s139 + $0x10] sm:$0xff]
      %v150 = vld [vmem:[%s139 + $0x18] sm:$0xff]
      %v151 = vld [vmem:[%s139 + $0x20] sm:$0xff]
      %v152 = vld [vmem:[%s139 + $0x28] sm:$0xff]
      %v153 = vld [vmem:[%s139 + $0x30] sm:$0xff]
      %v154 = vld [vmem:[%s139 + $0x38] sm:$0xff]
      %v155 = vld [vmem:[%s139 + $0x40] sm:$0xff]
      %v156 = vld [vmem:[%s139 + $0x48] sm:$0xff]
      %v157 = vld [vmem:[%s139 + $0x50] sm:$0xff]
      %v158 = vld [vmem:[%s139 + $0x58] sm:$0xff]
      %v159 = vld [vmem:[%s139 + $0x60] sm:$0xff]
      %v160 = vld [vmem:[%s139 + $0x68] sm:$0xff]
      %v161 = vld [vmem:[%s139 + $0x70] sm:$0xff]
      %v162 = vld [vmem:[%s139 + $0x78] sm:$0xff]
      %v163 = vld [vmem:[%s1] sm:$0xff]
      %v164 = vld [vmem:[%s1 + $0x8] sm:$0xff]
      %v165 = vld [vmem:[%s1 + $0x10] sm:$0xff]
      %v166 = vld [vmem:[%s1 + $0x18] sm:$0xff]
      %v167 = vld [vmem:[%s1 + $0x20] sm:$0x1]
      %v168 = vlaneseq
      %v169 = vshrl.u32 %v168, 7
      %v170 = vadd.s32 %v169, 8
      %vm171 = vcmp.lt.s32.totalorder %v169, 0
      %v172 = vsub.s32 0, %v169
      %v173 = vsel %vm171, %v172, %v169
      %v174 = vshrl.u32 %v173, 2
      %v175 = vand.u32 %v173, 3
      %v176 = vsub.s32 0, %v175
      %v177 = vsel %vm171, %v176, %v175
      %vm178 = vcmp.lt.s32.totalorder %v170, 0
      %v179 = vsub.s32 0, %v170
      %v180 = vsel %vm178, %v179, %v170
      %v181 = vshrl.u32 %v180, 2
      %v182 = vand.u32 %v180, 3
      %v183 = vsub.s32 0, %v182
      %v184 = vsel %vm178, %v183, %v182
      %vm185 = vcmp.ne.s32.totalorder %v177, 0
      %vm186 = vcmp.ne.s32.totalorder %v184, 0
      %vm187 = vcmp.lt.s32.totalorder %v177, 0
      %vm188 = vcmp.lt.s32.totalorder %v184, 0
      %vm189 = vmand %vm187, %vm185
      %vm190 = vmand %vm188, %vm186
      %v191 = vadd.s32 %v177, 4
      %v192 = vadd.s32 %v184, 4
      %v193 = vsel %vm189, %v191, %v177
      %v194 = vsel %vm190, %v192, %v184
      %v195 = vlaneseq
      %v196 = vand.u32 %v195, 127
      %vm197 = vcmp.eq.s32.totalorder %v193, %v196
      %vm198 = vcmp.eq.s32.totalorder %v194, %v196
      %v199 = vsel %vm197, 1, 0
      %v200 = vsel %vm198, 1, 0
      %v201 = vcvt.s32.f32 %v199
      %v202 = vcvt.s32.f32 %v200
      %vm203 = vcmask 97280
      %v205 = vsel %vm203, %v147, 0
      %v208 = vsel %vm203, %v148, 0
      %v211 = vsel %vm203, %v149, 0
      %v214 = vsel %vm203, %v150, 0
      %v217 = vsel %vm203, %v151, 0
      %v220 = vsel %vm203, %v152, 0
      %v223 = vsel %vm203, %v153, 0
      %v226 = vsel %vm203, %v154, 0
      %v229 = vsel %vm203, %v155, 0
      %v232 = vsel %vm203, %v156, 0
      %v235 = vsel %vm203, %v157, 0
      %v238 = vsel %vm203, %v158, 0
      %v241 = vsel %vm203, %v159, 0
      %v244 = vsel %vm203, %v160, 0
      %v247 = vsel %vm203, %v161, 0
      %v250 = vsel %vm203, %v162, 0
      %vm252 = vcmask 1043456
      %v254 = vsel %vm252, %v202, 0
      %256 = vmatprep.subr.mxu0 0.0
      %257 = vmatpush1.msra.mxu0 0.0
      %258 = vmatprep.subr.mxu0 0.0
      %259 = vmatpush1.msra.mxu0 0.0
      %260 = vmatprep.subr.mxu0 0.0
      %261 = vmatpush1.msra.mxu0 0.0
      %262 = vmatprep.subr.mxu0 0.0
      %263 = vmatpush1.msra.mxu0 0.0
      %264 = vmatprep.subr.mxu0 0.0
      %265 = vmatpush1.msra.mxu0 0.0
      %266 = vmatprep.subr.mxu0 0.0
      %267 = vmatpush1.msra.mxu0 0.0
      %268 = vmatprep.subr.mxu0 0.0
      %269 = vmatpush1.msra.mxu0 0.0
      %270 = vmatprep.subr.mxu0 0.0
      %271 = vmatpush1.msra.mxu0 0.0
      %272 = vmatprep.subr.mxu0 0.0
      %273 = vmatpush1.msra.mxu0 0.0
      %274 = vmatprep.subr.mxu0 0.0
      %275 = vmatpush1.msra.mxu0 0.0
      %276 = vmatprep.subr.mxu0 0.0
      %277 = vmatpush1.msra.mxu0 0.0
      %278 = vmatprep.subr.mxu0 0.0
      %279 = vmatpush1.msra.mxu0 0.0
      %280 = vmatprep.subr.mxu0 0.0
      %281 = vmatpush1.msra.mxu0 0.0
      %282 = vmatprep.subr.mxu0 0.0
      %283 = vmatpush1.msra.mxu0 0.0
      %284 = vmatprep.subr.mxu0 0.0
      %285 = vmatpush1.msra.mxu0 %v254
      %286 = vmatprep.subr.mxu0 0.0
      %287 = vmatpush1.msra.mxu0 %v201
      %288 = vmatprep.subr.mxu0 0.0
      %289 = vmatpush2.msra.mxu0 0.0
      %290 = vmatprep.subr.mxu0 0.0
      %291 = vmatpush2.msra.mxu0 0.0
      %292 = vmatprep.subr.mxu0 0.0
      %293 = vmatpush2.msra.mxu0 0.0
      %294 = vmatprep.subr.mxu0 0.0
      %295 = vmatpush2.msra.mxu0 0.0
      %296 = vmatprep.subr.mxu0 0.0
      %297 = vmatpush2.msra.mxu0 0.0
      %298 = vmatprep.subr.mxu0 0.0
      %299 = vmatpush2.msra.mxu0 0.0
      %300 = vmatprep.subr.mxu0 0.0
      %301 = vmatpush2.msra.mxu0 0.0
      %302 = vmatprep.subr.mxu0 0.0
      %303 = vmatpush2.msra.mxu0 0.0
      %304 = vmatprep.subr.mxu0 0.0
      %305 = vmatpush2.msra.mxu0 0.0
      %306 = vmatprep.subr.mxu0 0.0
      %307 = vmatpush2.msra.mxu0 0.0
      %308 = vmatprep.subr.mxu0 0.0
      %309 = vmatpush2.msra.mxu0 0.0
      %310 = vmatprep.subr.mxu0 0.0
      %311 = vmatpush2.msra.mxu0 0.0
      %312 = vmatprep.subr.mxu0 0.0
      %313 = vmatpush2.msra.mxu0 0.0
      %314 = vmatprep.subr.mxu0 0.0
      %315 = vmatpush2.msra.mxu0 0.0
      %316 = vmatprep.subr.mxu0 0.0
      %317 = vmatpush2.msra.mxu0 0.0
      %318 = vmatprep.subr.mxu0 0.0
      %319 = vmatpush2.msra.mxu0 0.0
      %320 = vmatprep.mubr.f32.mxu0 0.0
      %321 = vmatmul.mubr.f32.gmra.mxu0 %v205
      %v322 = vpop.f32.mrf.mxu0
      %v323 = vadd.f32 0.0, %v322
      %v324 = vpop.f32.mrf.mxu0
      %325 = vmatprep.mubr.f32.mxu0 0.0
      %326 = vmatmul.mubr.f32.gmra.mxu0 %v208
      %v327 = vpop.f32.mrf.mxu0
      %v328 = vadd.f32 0.0, %v327
      %v329 = vpop.f32.mrf.mxu0
      %330 = vmatprep.mubr.f32.mxu0 0.0
      %331 = vmatmul.mubr.f32.gmra.mxu0 %v211
      %v332 = vpop.f32.mrf.mxu0
      %v333 = vadd.f32 0.0, %v332
      %v334 = vpop.f32.mrf.mxu0
      %335 = vmatprep.mubr.f32.mxu0 0.0
      %336 = vmatmul.mubr.f32.gmra.mxu0 %v214
      %v337 = vpop.f32.mrf.mxu0
      %v338 = vadd.f32 0.0, %v337
      %v339 = vpop.f32.mrf.mxu0
      %340 = vmatprep.mubr.f32.mxu0 0.0
      %341 = vmatmul.mubr.f32.gmra.mxu0 %v217
      %v342 = vpop.f32.mrf.mxu0
      %v343 = vadd.f32 0.0, %v342
      %v344 = vpop.f32.mrf.mxu0
      %345 = vmatprep.mubr.f32.mxu0 0.0
      %346 = vmatmul.mubr.f32.gmra.mxu0 %v220
      %v347 = vpop.f32.mrf.mxu0
      %v348 = vadd.f32 0.0, %v347
      %v349 = vpop.f32.mrf.mxu0
      %350 = vmatprep.mubr.f32.mxu0 0.0
      %351 = vmatmul.mubr.f32.gmra.mxu0 %v223
      %v352 = vpop.f32.mrf.mxu0
      %v353 = vadd.f32 0.0, %v352
      %v354 = vpop.f32.mrf.mxu0
      %355 = vmatprep.mubr.f32.mxu0 0.0
      %356 = vmatmul.mubr.f32.gmra.mxu0 %v226
      %v357 = vpop.f32.mrf.mxu0
      %v358 = vadd.f32 0.0, %v357
      %v359 = vpop.f32.mrf.mxu0
      %360 = vmatprep.mubr.f32.mxu0 0.0
      %361 = vmatmul.mubr.f32.gmra.mxu0 %v229
      %v362 = vpop.f32.mrf.mxu0
      %v363 = vadd.f32 0.0, %v362
      %v364 = vpop.f32.mrf.mxu0
      %365 = vmatprep.mubr.f32.mxu0 0.0
      %366 = vmatmul.mubr.f32.gmra.mxu0 %v232
      %v367 = vpop.f32.mrf.mxu0
      %v368 = vadd.f32 0.0, %v367
      %v369 = vpop.f32.mrf.mxu0
      %370 = vmatprep.mubr.f32.mxu0 0.0
      %371 = vmatmul.mubr.f32.gmra.mxu0 %v235
      %v372 = vpop.f32.mrf.mxu0
      %v373 = vadd.f32 0.0, %v372
      %v374 = vpop.f32.mrf.mxu0
      %375 = vmatprep.mubr.f32.mxu0 0.0
      %376 = vmatmul.mubr.f32.gmra.mxu0 %v238
      %v377 = vpop.f32.mrf.mxu0
      %v378 = vadd.f32 0.0, %v377
      %v379 = vpop.f32.mrf.mxu0
      %380 = vmatprep.mubr.f32.mxu0 0.0
      %381 = vmatmul.mubr.f32.gmra.mxu0 %v241
      %v382 = vpop.f32.mrf.mxu0
      %v383 = vadd.f32 0.0, %v382
      %v384 = vpop.f32.mrf.mxu0
      %385 = vmatprep.mubr.f32.mxu0 0.0
      %386 = vmatmul.mubr.f32.gmra.mxu0 %v244
      %v387 = vpop.f32.mrf.mxu0
      %v388 = vadd.f32 0.0, %v387
      %v389 = vpop.f32.mrf.mxu0
      %390 = vmatprep.mubr.f32.mxu0 0.0
      %391 = vmatmul.mubr.f32.gmra.mxu0 %v247
      %v392 = vpop.f32.mrf.mxu0
      %v393 = vadd.f32 0.0, %v392
      %v394 = vpop.f32.mrf.mxu0
      %395 = vmatprep.mubr.f32.mxu0 0.0
      %396 = vmatmul.mubr.f32.gmra.mxu0 %v250
      %v397 = vpop.f32.mrf.mxu0
      %v398 = vadd.f32 0.0, %v397
      %v399 = vpop.f32.mrf.mxu0
      %400 = vdwg.mxu0
      %v401 = vmul.f32 %v147, %v147
      %v402 = vmul.f32 %v148, %v148
      %v403 = vmul.f32 %v149, %v149
      %v404 = vmul.f32 %v150, %v150
      %v405 = vmul.f32 %v151, %v151
      %v406 = vmul.f32 %v152, %v152
      %v407 = vmul.f32 %v153, %v153
      %v408 = vmul.f32 %v154, %v154
      %v409 = vmul.f32 %v155, %v155
      %v410 = vmul.f32 %v156, %v156
      %v411 = vmul.f32 %v157, %v157
      %v412 = vmul.f32 %v158, %v158
      %v413 = vmul.f32 %v159, %v159
      %v414 = vmul.f32 %v160, %v160
      %v415 = vmul.f32 %v161, %v161
      %v416 = vmul.f32 %v162, %v162
      %v418 = vsel %vm203, %v401, 0
      %v421 = vsel %vm203, %v402, 0
      %v424 = vsel %vm203, %v403, 0
      %v427 = vsel %vm203, %v404, 0
      %v430 = vsel %vm203, %v405, 0
      %v433 = vsel %vm203, %v406, 0
      %v436 = vsel %vm203, %v407, 0
      %v439 = vsel %vm203, %v408, 0
      %v442 = vsel %vm203, %v409, 0
      %v445 = vsel %vm203, %v410, 0
      %v448 = vsel %vm203, %v411, 0
      %v451 = vsel %vm203, %v412, 0
      %v454 = vsel %vm203, %v413, 0
      %v457 = vsel %vm203, %v414, 0
      %v460 = vsel %vm203, %v415, 0
      %v463 = vsel %vm203, %v416, 0
      %465 = vmatprep.subr.mxu0 0.0
      %466 = vmatpush1.msra.mxu0 0.0
      %467 = vmatprep.subr.mxu0 0.0
      %468 = vmatpush1.msra.mxu0 0.0
      %469 = vmatprep.subr.mxu0 0.0
      %470 = vmatpush1.msra.mxu0 0.0
      %471 = vmatprep.subr.mxu0 0.0
      %472 = vmatpush1.msra.mxu0 0.0
      %473 = vmatprep.subr.mxu0 0.0
      %474 = vmatpush1.msra.mxu0 0.0
      %475 = vmatprep.subr.mxu0 0.0
      %476 = vmatpush1.msra.mxu0 0.0
      %477 = vmatprep.subr.mxu0 0.0
      %478 = vmatpush1.msra.mxu0 0.0
      %479 = vmatprep.subr.mxu0 0.0
      %480 = vmatpush1.msra.mxu0 0.0
      %481 = vmatprep.subr.mxu0 0.0
      %482 = vmatpush1.msra.mxu0 0.0
      %483 = vmatprep.subr.mxu0 0.0
      %484 = vmatpush1.msra.mxu0 0.0
      %485 = vmatprep.subr.mxu0 0.0
      %486 = vmatpush1.msra.mxu0 0.0
      %487 = vmatprep.subr.mxu0 0.0
      %488 = vmatpush1.msra.mxu0 0.0
      %489 = vmatprep.subr.mxu0 0.0
      %490 = vmatpush1.msra.mxu0 0.0
      %491 = vmatprep.subr.mxu0 0.0
      %492 = vmatpush1.msra.mxu0 0.0
      %493 = vmatprep.subr.mxu0 0.0
      %494 = vmatpush1.msra.mxu0 %v254
      %495 = vmatprep.subr.mxu0 0.0
      %496 = vmatpush1.msra.mxu0 %v201
      %497 = vmatprep.subr.mxu0 0.0
      %498 = vmatpush2.msra.mxu0 0.0
      %499 = vmatprep.subr.mxu0 0.0
      %500 = vmatpush2.msra.mxu0 0.0
      %501 = vmatprep.subr.mxu0 0.0
      %502 = vmatpush2.msra.mxu0 0.0
      %503 = vmatprep.subr.mxu0 0.0
      %504 = vmatpush2.msra.mxu0 0.0
      %505 = vmatprep.subr.mxu0 0.0
      %506 = vmatpush2.msra.mxu0 0.0
      %507 = vmatprep.subr.mxu0 0.0
      %508 = vmatpush2.msra.mxu0 0.0
      %509 = vmatprep.subr.mxu0 0.0
      %510 = vmatpush2.msra.mxu0 0.0
      %511 = vmatprep.subr.mxu0 0.0
      %512 = vmatpush2.msra.mxu0 0.0
      %513 = vmatprep.subr.mxu0 0.0
      %514 = vmatpush2.msra.mxu0 0.0
      %515 = vmatprep.subr.mxu0 0.0
      %516 = vmatpush2.msra.mxu0 0.0
      %517 = vmatprep.subr.mxu0 0.0
      %518 = vmatpush2.msra.mxu0 0.0
      %519 = vmatprep.subr.mxu0 0.0
      %520 = vmatpush2.msra.mxu0 0.0
      %521 = vmatprep.subr.mxu0 0.0
      %522 = vmatpush2.msra.mxu0 0.0
      %523 = vmatprep.subr.mxu0 0.0
      %524 = vmatpush2.msra.mxu0 0.0
      %525 = vmatprep.subr.mxu0 0.0
      %526 = vmatpush2.msra.mxu0 0.0
      %527 = vmatprep.subr.mxu0 0.0
      %528 = vmatpush2.msra.mxu0 0.0
      %529 = vmatprep.mubr.f32.mxu0 0.0
      %530 = vmatmul.mubr.f32.gmra.mxu0 %v418
      %v531 = vpop.f32.mrf.mxu0
      %v532 = vadd.f32 0.0, %v531
      %v533 = vpop.f32.mrf.mxu0
      %534 = vmatprep.mubr.f32.mxu0 0.0
      %535 = vmatmul.mubr.f32.gmra.mxu0 %v421
      %v536 = vpop.f32.mrf.mxu0
      %v537 = vadd.f32 0.0, %v536
      %v538 = vpop.f32.mrf.mxu0
      %539 = vmatprep.mubr.f32.mxu0 0.0
      %540 = vmatmul.mubr.f32.gmra.mxu0 %v424
      %v541 = vpop.f32.mrf.mxu0
      %v542 = vadd.f32 0.0, %v541
      %v543 = vpop.f32.mrf.mxu0
      %544 = vmatprep.mubr.f32.mxu0 0.0
      %545 = vmatmul.mubr.f32.gmra.mxu0 %v427
      %v546 = vpop.f32.mrf.mxu0
      %v547 = vadd.f32 0.0, %v546
      %v548 = vpop.f32.mrf.mxu0
      %549 = vmatprep.mubr.f32.mxu0 0.0
      %550 = vmatmul.mubr.f32.gmra.mxu0 %v430
      %v551 = vpop.f32.mrf.mxu0
      %v552 = vadd.f32 0.0, %v551
      %v553 = vpop.f32.mrf.mxu0
      %554 = vmatprep.mubr.f32.mxu0 0.0
      %555 = vmatmul.mubr.f32.gmra.mxu0 %v433
      %v556 = vpop.f32.mrf.mxu0
      %v557 = vadd.f32 0.0, %v556
      %v558 = vpop.f32.mrf.mxu0
      %559 = vmatprep.mubr.f32.mxu0 0.0
      %560 = vmatmul.mubr.f32.gmra.mxu0 %v436
      %v561 = vpop.f32.mrf.mxu0
      %v562 = vadd.f32 0.0, %v561
      %v563 = vpop.f32.mrf.mxu0
      %564 = vmatprep.mubr.f32.mxu0 0.0
      %565 = vmatmul.mubr.f32.gmra.mxu0 %v439
      %v566 = vpop.f32.mrf.mxu0
      %v567 = vadd.f32 0.0, %v566
      %v568 = vpop.f32.mrf.mxu0
      %569 = vmatprep.mubr.f32.mxu0 0.0
      %570 = vmatmul.mubr.f32.gmra.mxu0 %v442
      %v571 = vpop.f32.mrf.mxu0
      %v572 = vadd.f32 0.0, %v571
      %v573 = vpop.f32.mrf.mxu0
      %574 = vmatprep.mubr.f32.mxu0 0.0
      %575 = vmatmul.mubr.f32.gmra.mxu0 %v445
      %v576 = vpop.f32.mrf.mxu0
      %v577 = vadd.f32 0.0, %v576
      %v578 = vpop.f32.mrf.mxu0
      %579 = vmatprep.mubr.f32.mxu0 0.0
      %580 = vmatmul.mubr.f32.gmra.mxu0 %v448
      %v581 = vpop.f32.mrf.mxu0
      %v582 = vadd.f32 0.0, %v581
      %v583 = vpop.f32.mrf.mxu0
      %584 = vmatprep.mubr.f32.mxu0 0.0
      %585 = vmatmul.mubr.f32.gmra.mxu0 %v451
      %v586 = vpop.f32.mrf.mxu0
      %v587 = vadd.f32 0.0, %v586
      %v588 = vpop.f32.mrf.mxu0
      %589 = vmatprep.mubr.f32.mxu0 0.0
      %590 = vmatmul.mubr.f32.gmra.mxu0 %v454
      %v591 = vpop.f32.mrf.mxu0
      %v592 = vadd.f32 0.0, %v591
      %v593 = vpop.f32.mrf.mxu0
      %594 = vmatprep.mubr.f32.mxu0 0.0
      %595 = vmatmul.mubr.f32.gmra.mxu0 %v457
      %v596 = vpop.f32.mrf.mxu0
      %v597 = vadd.f32 0.0, %v596
      %v598 = vpop.f32.mrf.mxu0
      %599 = vmatprep.mubr.f32.mxu0 0.0
      %600 = vmatmul.mubr.f32.gmra.mxu0 %v460
      %v601 = vpop.f32.mrf.mxu0
      %v602 = vadd.f32 0.0, %v601
      %v603 = vpop.f32.mrf.mxu0
      %604 = vmatprep.mubr.f32.mxu0 0.0
      %605 = vmatmul.mubr.f32.gmra.mxu0 %v463
      %v606 = vpop.f32.mrf.mxu0
      %v607 = vadd.f32 0.0, %v606
      %v608 = vpop.f32.mrf.mxu0
      %609 = vdwg.mxu0
      %v610 = vmul.f32 %v323, %v323
      %v611 = vmul.f32 %v328, %v328
      %v612 = vmul.f32 %v333, %v333
      %v613 = vmul.f32 %v338, %v338
      %v614 = vmul.f32 %v343, %v343
      %v615 = vmul.f32 %v348, %v348
      %v616 = vmul.f32 %v353, %v353
      %v617 = vmul.f32 %v358, %v358
      %v618 = vmul.f32 %v363, %v363
      %v619 = vmul.f32 %v368, %v368
      %v620 = vmul.f32 %v373, %v373
      %v621 = vmul.f32 %v378, %v378
      %v622 = vmul.f32 %v383, %v383
      %v623 = vmul.f32 %v388, %v388
      %v624 = vmul.f32 %v393, %v393
      %v625 = vmul.f32 %v398, %v398
      %v626 = vsub.f32 %v610, %v532
      %v627 = vsub.f32 %v611, %v537
      %v628 = vsub.f32 %v612, %v542
      %v629 = vsub.f32 %v613, %v547
      %v630 = vsub.f32 %v614, %v552
      %v631 = vsub.f32 %v615, %v557
      %v632 = vsub.f32 %v616, %v562
      %v633 = vsub.f32 %v617, %v567
      %v634 = vsub.f32 %v618, %v572
      %v635 = vsub.f32 %v619, %v577
      %v636 = vsub.f32 %v620, %v582
      %v637 = vsub.f32 %v621, %v587
      %v638 = vsub.f32 %v622, %v592
      %v639 = vsub.f32 %v623, %v597
      %v640 = vsub.f32 %v624, %v602
      %v641 = vsub.f32 %v625, %v607
      %v642 = vmul.f32 %v626, 0.5
      %v643 = vmul.f32 %v627, 0.5
      %v644 = vmul.f32 %v628, 0.5
      %v645 = vmul.f32 %v629, 0.5
      %v646 = vmul.f32 %v630, 0.5
      %v647 = vmul.f32 %v631, 0.5
      %v648 = vmul.f32 %v632, 0.5
      %v649 = vmul.f32 %v633, 0.5
      %v650 = vmul.f32 %v634, 0.5
      %v651 = vmul.f32 %v635, 0.5
      %v652 = vmul.f32 %v636, 0.5
      %v653 = vmul.f32 %v637, 0.5
      %v654 = vmul.f32 %v638, 0.5
      %v655 = vmul.f32 %v639, 0.5
      %v656 = vmul.f32 %v640, 0.5
      %v657 = vmul.f32 %v641, 0.5
      %vm658 = vcmask 31744
      %v660 = vsel %vm658, %v642, 0
      %v663 = vsel %vm658, %v643, 0
      %v666 = vsel %vm658, %v644, 0
      %v669 = vsel %vm658, %v645, 0
      %v672 = vsel %vm658, %v646, 0
      %v675 = vsel %vm658, %v647, 0
      %v678 = vsel %vm658, %v648, 0
      %v681 = vsel %vm658, %v649, 0
      %v684 = vsel %vm658, %v650, 0
      %v687 = vsel %vm658, %v651, 0
      %v690 = vsel %vm658, %v652, 0
      %v693 = vsel %vm658, %v653, 0
      %v696 = vsel %vm658, %v654, 0
      %v699 = vsel %vm658, %v655, 0
      %v702 = vsel %vm658, %v656, 0
      %v705 = vsel %vm658, %v657, 0
      %v708 = vsel %vm252, 1.0, 0
      %710 = vmatprep.subr.mxu0 0.0
      %711 = vmatpush1.msra.mxu0 0.0
      %712 = vmatprep.subr.mxu0 0.0
      %713 = vmatpush1.msra.mxu0 0.0
      %714 = vmatprep.subr.mxu0 0.0
      %715 = vmatpush1.msra.mxu0 0.0
      %716 = vmatprep.subr.mxu0 0.0
      %717 = vmatpush1.msra.mxu0 0.0
      %718 = vmatprep.subr.mxu0 0.0
      %719 = vmatpush1.msra.mxu0 0.0
      %720 = vmatprep.subr.mxu0 0.0
      %721 = vmatpush1.msra.mxu0 0.0
      %722 = vmatprep.subr.mxu0 0.0
      %723 = vmatpush1.msra.mxu0 0.0
      %724 = vmatprep.subr.mxu0 0.0
      %725 = vmatpush1.msra.mxu0 0.0
      %726 = vmatprep.subr.mxu0 0.0
      %727 = vmatpush1.msra.mxu0 0.0
      %728 = vmatprep.subr.mxu0 0.0
      %729 = vmatpush1.msra.mxu0 0.0
      %730 = vmatprep.subr.mxu0 0.0
      %731 = vmatpush1.msra.mxu0 0.0
      %732 = vmatprep.subr.mxu0 0.0
      %733 = vmatpush1.msra.mxu0 0.0
      %734 = vmatprep.subr.mxu0 0.0
      %735 = vmatpush1.msra.mxu0 0.0
      %736 = vmatprep.subr.mxu0 0.0
      %737 = vmatpush1.msra.mxu0 0.0
      %738 = vmatprep.subr.mxu0 0.0
      %739 = vmatpush1.msra.mxu0 0.0
      %740 = vmatprep.subr.mxu0 0.0
      %741 = vmatpush1.msra.mxu0 %v708
      %742 = vmatprep.subr.mxu0 0.0
      %743 = vmatpush2.msra.mxu0 0.0
      %744 = vmatprep.subr.mxu0 0.0
      %745 = vmatpush2.msra.mxu0 0.0
      %746 = vmatprep.subr.mxu0 0.0
      %747 = vmatpush2.msra.mxu0 0.0
      %748 = vmatprep.subr.mxu0 0.0
      %749 = vmatpush2.msra.mxu0 0.0
      %750 = vmatprep.subr.mxu0 0.0
      %751 = vmatpush2.msra.mxu0 0.0
      %752 = vmatprep.subr.mxu0 0.0
      %753 = vmatpush2.msra.mxu0 0.0
      %754 = vmatprep.subr.mxu0 0.0
      %755 = vmatpush2.msra.mxu0 0.0
      %756 = vmatprep.subr.mxu0 0.0
      %757 = vmatpush2.msra.mxu0 0.0
      %758 = vmatprep.subr.mxu0 0.0
      %759 = vmatpush2.msra.mxu0 0.0
      %760 = vmatprep.subr.mxu0 0.0
      %761 = vmatpush2.msra.mxu0 0.0
      %762 = vmatprep.subr.mxu0 0.0
      %763 = vmatpush2.msra.mxu0 0.0
      %764 = vmatprep.subr.mxu0 0.0
      %765 = vmatpush2.msra.mxu0 0.0
      %766 = vmatprep.subr.mxu0 0.0
      %767 = vmatpush2.msra.mxu0 0.0
      %768 = vmatprep.subr.mxu0 0.0
      %769 = vmatpush2.msra.mxu0 0.0
      %770 = vmatprep.subr.mxu0 0.0
      %771 = vmatpush2.msra.mxu0 0.0
      %772 = vmatprep.subr.mxu0 0.0
      %773 = vmatpush2.msra.mxu0 0.0
      %774 = vmatprep.mubr.f32.mxu0 0.0
      %775 = vmatmul.mubr.f32.gmra.mxu0 %v660
      %v776 = vpop.f32.mrf.mxu0
      %v777 = vadd.f32 0.0, %v776
      %v778 = vpop.f32.mrf.mxu0
      %779 = vmatprep.mubr.f32.mxu0 0.0
      %780 = vmatmul.mubr.f32.gmra.mxu0 %v663
      %v781 = vpop.f32.mrf.mxu0
      %v782 = vadd.f32 0.0, %v781
      %v783 = vpop.f32.mrf.mxu0
      %784 = vmatprep.mubr.f32.mxu0 0.0
      %785 = vmatmul.mubr.f32.gmra.mxu0 %v666
      %v786 = vpop.f32.mrf.mxu0
      %v787 = vadd.f32 0.0, %v786
      %v788 = vpop.f32.mrf.mxu0
      %789 = vmatprep.mubr.f32.mxu0 0.0
      %790 = vmatmul.mubr.f32.gmra.mxu0 %v669
      %v791 = vpop.f32.mrf.mxu0
      %v792 = vadd.f32 0.0, %v791
      %v793 = vpop.f32.mrf.mxu0
      %794 = vmatprep.mubr.f32.mxu0 0.0
      %795 = vmatmul.mubr.f32.gmra.mxu0 %v672
      %v796 = vpop.f32.mrf.mxu0
      %v797 = vadd.f32 0.0, %v796
      %v798 = vpop.f32.mrf.mxu0
      %799 = vmatprep.mubr.f32.mxu0 0.0
      %800 = vmatmul.mubr.f32.gmra.mxu0 %v675
      %v801 = vpop.f32.mrf.mxu0
      %v802 = vadd.f32 0.0, %v801
      %v803 = vpop.f32.mrf.mxu0
      %804 = vmatprep.mubr.f32.mxu0 0.0
      %805 = vmatmul.mubr.f32.gmra.mxu0 %v678
      %v806 = vpop.f32.mrf.mxu0
      %v807 = vadd.f32 0.0, %v806
      %v808 = vpop.f32.mrf.mxu0
      %809 = vmatprep.mubr.f32.mxu0 0.0
      %810 = vmatmul.mubr.f32.gmra.mxu0 %v681
      %v811 = vpop.f32.mrf.mxu0
      %v812 = vadd.f32 0.0, %v811
      %v813 = vpop.f32.mrf.mxu0
      %814 = vmatprep.mubr.f32.mxu0 0.0
      %815 = vmatmul.mubr.f32.gmra.mxu0 %v684
      %v816 = vpop.f32.mrf.mxu0
      %v817 = vadd.f32 0.0, %v816
      %v818 = vpop.f32.mrf.mxu0
      %819 = vmatprep.mubr.f32.mxu0 0.0
      %820 = vmatmul.mubr.f32.gmra.mxu0 %v687
      %v821 = vpop.f32.mrf.mxu0
      %v822 = vadd.f32 0.0, %v821
      %v823 = vpop.f32.mrf.mxu0
      %824 = vmatprep.mubr.f32.mxu0 0.0
      %825 = vmatmul.mubr.f32.gmra.mxu0 %v690
      %v826 = vpop.f32.mrf.mxu0
      %v827 = vadd.f32 0.0, %v826
      %v828 = vpop.f32.mrf.mxu0
      %829 = vmatprep.mubr.f32.mxu0 0.0
      %830 = vmatmul.mubr.f32.gmra.mxu0 %v693
      %v831 = vpop.f32.mrf.mxu0
      %v832 = vadd.f32 0.0, %v831
      %v833 = vpop.f32.mrf.mxu0
      %834 = vmatprep.mubr.f32.mxu0 0.0
      %835 = vmatmul.mubr.f32.gmra.mxu0 %v696
      %v836 = vpop.f32.mrf.mxu0
      %v837 = vadd.f32 0.0, %v836
      %v838 = vpop.f32.mrf.mxu0
      %839 = vmatprep.mubr.f32.mxu0 0.0
      %840 = vmatmul.mubr.f32.gmra.mxu0 %v699
      %v841 = vpop.f32.mrf.mxu0
      %v842 = vadd.f32 0.0, %v841
      %v843 = vpop.f32.mrf.mxu0
      %844 = vmatprep.mubr.f32.mxu0 0.0
      %845 = vmatmul.mubr.f32.gmra.mxu0 %v702
      %v846 = vpop.f32.mrf.mxu0
      %v847 = vadd.f32 0.0, %v846
      %v848 = vpop.f32.mrf.mxu0
      %849 = vmatprep.mubr.f32.mxu0 0.0
      %850 = vmatmul.mubr.f32.gmra.mxu0 %v705
      %v851 = vpop.f32.mrf.mxu0
      %v852 = vadd.f32 0.0, %v851
      %v853 = vpop.f32.mrf.mxu0
      %854 = vdwg.mxu0
      %v855 = vlaneseq
      %v856 = vshrl.u32 %v855, 7
      %v857 = vsub.s32 0, %v856
      %v858 = vrot.slane %v167, %v857
      %vm859 = vcmask 195584
      %v860 = vsel %vm859, %v147, 0
      %v862 = vsel %vm859, %v148, 0
      %v864 = vsel %vm859, %v149, 0
      %v866 = vsel %vm859, %v150, 0
      %v868 = vsel %vm859, %v151, 0
      %v870 = vsel %vm859, %v152, 0
      %v872 = vsel %vm859, %v153, 0
      %v874 = vsel %vm859, %v154, 0
      %v876 = vsel %vm859, %v155, 0
      %v878 = vsel %vm859, %v156, 0
      %v880 = vsel %vm859, %v157, 0
      %v882 = vsel %vm859, %v158, 0
      %v884 = vsel %vm859, %v159, 0
      %v886 = vsel %vm859, %v160, 0
      %v888 = vsel %vm859, %v161, 0
      %v890 = vsel %vm859, %v162, 0
      %892 = vmatprep.subr.mxu0 0.0
      %893 = vmatpush1.msra.mxu0 0.0
      %894 = vmatprep.subr.mxu0 0.0
      %895 = vmatpush1.msra.mxu0 0.0
      %896 = vmatprep.subr.mxu0 0.0
      %897 = vmatpush1.msra.mxu0 0.0
      %898 = vmatprep.subr.mxu0 0.0
      %899 = vmatpush1.msra.mxu0 0.0
      %900 = vmatprep.subr.mxu0 0.0
      %901 = vmatpush1.msra.mxu0 0.0
      %902 = vmatprep.subr.mxu0 0.0
      %903 = vmatpush1.msra.mxu0 0.0
      %904 = vmatprep.subr.mxu0 0.0
      %905 = vmatpush1.msra.mxu0 0.0
      %906 = vmatprep.subr.mxu0 0.0
      %907 = vmatpush1.msra.mxu0 0.0
      %908 = vmatprep.subr.mxu0 0.0
      %909 = vmatpush1.msra.mxu0 0.0
      %910 = vmatprep.subr.mxu0 0.0
      %911 = vmatpush1.msra.mxu0 0.0
      %912 = vmatprep.subr.mxu0 0.0
      %913 = vmatpush1.msra.mxu0 0.0
      %914 = vmatprep.subr.mxu0 0.0
      %915 = vmatpush1.msra.mxu0 0.0
      %916 = vmatprep.subr.mxu0 0.0
      %917 = vmatpush1.msra.mxu0 0.0
      %918 = vmatprep.subr.mxu0 0.0
      %919 = vmatpush1.msra.mxu0 %v165
      %920 = vmatprep.subr.mxu0 0.0
      %921 = vmatpush1.msra.mxu0 %v164
      %922 = vmatprep.subr.mxu0 0.0
      %923 = vmatpush1.msra.mxu0 %v163
      %924 = vmatprep.subr.mxu0 0.0
      %925 = vmatpush2.msra.mxu0 0.0
      %926 = vmatprep.subr.mxu0 0.0
      %927 = vmatpush2.msra.mxu0 0.0
      %928 = vmatprep.subr.mxu0 0.0
      %929 = vmatpush2.msra.mxu0 0.0
      %930 = vmatprep.subr.mxu0 0.0
      %931 = vmatpush2.msra.mxu0 0.0
      %932 = vmatprep.subr.mxu0 0.0
      %933 = vmatpush2.msra.mxu0 0.0
      %934 = vmatprep.subr.mxu0 0.0
      %935 = vmatpush2.msra.mxu0 0.0
      %936 = vmatprep.subr.mxu0 0.0
      %937 = vmatpush2.msra.mxu0 0.0
      %938 = vmatprep.subr.mxu0 0.0
      %939 = vmatpush2.msra.mxu0 0.0
      %940 = vmatprep.subr.mxu0 0.0
      %941 = vmatpush2.msra.mxu0 0.0
      %942 = vmatprep.subr.mxu0 0.0
      %943 = vmatpush2.msra.mxu0 0.0
      %944 = vmatprep.subr.mxu0 0.0
      %945 = vmatpush2.msra.mxu0 0.0
      %946 = vmatprep.subr.mxu0 0.0
      %947 = vmatpush2.msra.mxu0 0.0
      %948 = vmatprep.subr.mxu0 0.0
      %949 = vmatpush2.msra.mxu0 0.0
      %950 = vmatprep.subr.mxu0 0.0
      %951 = vmatpush2.msra.mxu0 0.0
      %952 = vmatprep.subr.mxu0 0.0
      %953 = vmatpush2.msra.mxu0 0.0
      %954 = vmatprep.subr.mxu0 0.0
      %955 = vmatpush2.msra.mxu0 0.0
      %956 = vmatprep.mubr.f32.mxu0 0.0
      %957 = vmatmul.mubr.f32.gmra.mxu0 %v860
      %v958 = vpop.f32.mrf.mxu0
      %v959 = vadd.f32 %v858, %v958
      %v960 = vpop.f32.mrf.mxu0
      %961 = vmatprep.mubr.f32.mxu0 0.0
      %962 = vmatmul.mubr.f32.gmra.mxu0 %v862
      %v963 = vpop.f32.mrf.mxu0
      %v964 = vadd.f32 %v858, %v963
      %v965 = vpop.f32.mrf.mxu0
      %966 = vmatprep.mubr.f32.mxu0 0.0
      %967 = vmatmul.mubr.f32.gmra.mxu0 %v864
      %v968 = vpop.f32.mrf.mxu0
      %v969 = vadd.f32 %v858, %v968
      %v970 = vpop.f32.mrf.mxu0
      %971 = vmatprep.mubr.f32.mxu0 0.0
      %972 = vmatmul.mubr.f32.gmra.mxu0 %v866
      %v973 = vpop.f32.mrf.mxu0
      %v974 = vadd.f32 %v858, %v973
      %v975 = vpop.f32.mrf.mxu0
      %976 = vmatprep.mubr.f32.mxu0 0.0
      %977 = vmatmul.mubr.f32.gmra.mxu0 %v868
      %v978 = vpop.f32.mrf.mxu0
      %v979 = vadd.f32 %v858, %v978
      %v980 = vpop.f32.mrf.mxu0
      %981 = vmatprep.mubr.f32.mxu0 0.0
      %982 = vmatmul.mubr.f32.gmra.mxu0 %v870
      %v983 = vpop.f32.mrf.mxu0
      %v984 = vadd.f32 %v858, %v983
      %v985 = vpop.f32.mrf.mxu0
      %986 = vmatprep.mubr.f32.mxu0 0.0
      %987 = vmatmul.mubr.f32.gmra.mxu0 %v872
      %v988 = vpop.f32.mrf.mxu0
      %v989 = vadd.f32 %v858, %v988
      %v990 = vpop.f32.mrf.mxu0
      %991 = vmatprep.mubr.f32.mxu0 0.0
      %992 = vmatmul.mubr.f32.gmra.mxu0 %v874
      %v993 = vpop.f32.mrf.mxu0
      %v994 = vadd.f32 %v858, %v993
      %v995 = vpop.f32.mrf.mxu0
      %996 = vmatprep.mubr.f32.mxu0 0.0
      %997 = vmatmul.mubr.f32.gmra.mxu0 %v876
      %v998 = vpop.f32.mrf.mxu0
      %v999 = vadd.f32 %v858, %v998
      %v1000 = vpop.f32.mrf.mxu0
      %1001 = vmatprep.mubr.f32.mxu0 0.0
      %1002 = vmatmul.mubr.f32.gmra.mxu0 %v878
      %v1003 = vpop.f32.mrf.mxu0
      %v1004 = vadd.f32 %v858, %v1003
      %v1005 = vpop.f32.mrf.mxu0
      %1006 = vmatprep.mubr.f32.mxu0 0.0
      %1007 = vmatmul.mubr.f32.gmra.mxu0 %v880
      %v1008 = vpop.f32.mrf.mxu0
      %v1009 = vadd.f32 %v858, %v1008
      %v1010 = vpop.f32.mrf.mxu0
      %1011 = vmatprep.mubr.f32.mxu0 0.0
      %1012 = vmatmul.mubr.f32.gmra.mxu0 %v882
      %v1013 = vpop.f32.mrf.mxu0
      %v1014 = vadd.f32 %v858, %v1013
      %v1015 = vpop.f32.mrf.mxu0
      %1016 = vmatprep.mubr.f32.mxu0 0.0
      %1017 = vmatmul.mubr.f32.gmra.mxu0 %v884
      %v1018 = vpop.f32.mrf.mxu0
      %v1019 = vadd.f32 %v858, %v1018
      %v1020 = vpop.f32.mrf.mxu0
      %1021 = vmatprep.mubr.f32.mxu0 0.0
      %1022 = vmatmul.mubr.f32.gmra.mxu0 %v886
      %v1023 = vpop.f32.mrf.mxu0
      %v1024 = vadd.f32 %v858, %v1023
      %v1025 = vpop.f32.mrf.mxu0
      %1026 = vmatprep.mubr.f32.mxu0 0.0
      %1027 = vmatmul.mubr.f32.gmra.mxu0 %v888
      %v1028 = vpop.f32.mrf.mxu0
      %v1029 = vadd.f32 %v858, %v1028
      %v1030 = vpop.f32.mrf.mxu0
      %1031 = vmatprep.mubr.f32.mxu0 0.0
      %1032 = vmatmul.mubr.f32.gmra.mxu0 %v890
      %v1033 = vpop.f32.mrf.mxu0
      %v1034 = vadd.f32 %v858, %v1033
      %v1035 = vpop.f32.mrf.mxu0
      %1036 = vdwg.mxu0
      %v1037 = vmax.f32 %v959, 0.0
      %v1038 = vmax.f32 %v964, 0.0
      %v1039 = vmax.f32 %v969, 0.0
      %v1040 = vmax.f32 %v974, 0.0
      %v1041 = vmax.f32 %v979, 0.0
      %v1042 = vmax.f32 %v984, 0.0
      %v1043 = vmax.f32 %v989, 0.0
      %v1044 = vmax.f32 %v994, 0.0
      %v1045 = vmax.f32 %v999, 0.0
      %v1046 = vmax.f32 %v1004, 0.0
      %v1047 = vmax.f32 %v1009, 0.0
      %v1048 = vmax.f32 %v1014, 0.0
      %v1049 = vmax.f32 %v1019, 0.0
      %v1050 = vmax.f32 %v1024, 0.0
      %v1051 = vmax.f32 %v1029, 0.0
      %v1052 = vmax.f32 %v1034, 0.0
      %1057 = vrot.lane.b32.xlu0 %v163, 95
      %v1058 = vpop.permute.xlu0 %1057
      %1059 = vrot.lane.b32.xlu0 %v164, 95
      %v1060 = vpop.permute.xlu0 %1059
      %1061 = vrot.lane.b32.xlu0 %v165, 95
      %v1062 = vpop.permute.xlu0 %1061
      %1063 = vrot.lane.b32.xlu0 %v166, 95
      %v1064 = vpop.permute.xlu0 %1063
      %1070 = vrot.lane.b32.xlu0 %v858, 95
      %v1071 = vpop.permute.xlu0 %1070
      %vm1073 = vcmask 261120
      %v1075 = vsel %vm1073, %v1037, 0
      %v1078 = vsel %vm1073, %v1038, 0
      %v1081 = vsel %vm1073, %v1039, 0
      %v1084 = vsel %vm1073, %v1040, 0
      %v1087 = vsel %vm1073, %v1041, 0
      %v1090 = vsel %vm1073, %v1042, 0
      %v1093 = vsel %vm1073, %v1043, 0
      %v1096 = vsel %vm1073, %v1044, 0
      %v1099 = vsel %vm1073, %v1045, 0
      %v1102 = vsel %vm1073, %v1046, 0
      %v1105 = vsel %vm1073, %v1047, 0
      %v1108 = vsel %vm1073, %v1048, 0
      %v1111 = vsel %vm1073, %v1049, 0
      %v1114 = vsel %vm1073, %v1050, 0
      %v1117 = vsel %vm1073, %v1051, 0
      %v1120 = vsel %vm1073, %v1052, 0
      %1122 = vmatprep.subr.mxu0 0.0
      %1123 = vmatpush1.msra.mxu0 0.0
      %1124 = vmatprep.subr.mxu0 0.0
      %1125 = vmatpush1.msra.mxu0 0.0
      %1126 = vmatprep.subr.mxu0 0.0
      %1127 = vmatpush1.msra.mxu0 0.0
      %1128 = vmatprep.subr.mxu0 0.0
      %1129 = vmatpush1.msra.mxu0 0.0
      %1130 = vmatprep.subr.mxu0 0.0
      %1131 = vmatpush1.msra.mxu0 0.0
      %1132 = vmatprep.subr.mxu0 0.0
      %1133 = vmatpush1.msra.mxu0 0.0
      %1134 = vmatprep.subr.mxu0 0.0
      %1135 = vmatpush1.msra.mxu0 0.0
      %1136 = vmatprep.subr.mxu0 0.0
      %1137 = vmatpush1.msra.mxu0 0.0
      %1138 = vmatprep.subr.mxu0 0.0
      %1139 = vmatpush1.msra.mxu0 0.0
      %1140 = vmatprep.subr.mxu0 0.0
      %1141 = vmatpush1.msra.mxu0 0.0
      %1142 = vmatprep.subr.mxu0 0.0
      %1143 = vmatpush1.msra.mxu0 0.0
      %1144 = vmatprep.subr.mxu0 0.0
      %1145 = vmatpush1.msra.mxu0 0.0
      %1146 = vmatprep.subr.mxu0 0.0
      %1147 = vmatpush1.msra.mxu0 %v1064
      %1148 = vmatprep.subr.mxu0 0.0
      %1149 = vmatpush1.msra.mxu0 %v1062
      %1150 = vmatprep.subr.mxu0 0.0
      %1151 = vmatpush1.msra.mxu0 %v1060
      %1152 = vmatprep.subr.mxu0 0.0
      %1153 = vmatpush1.msra.mxu0 %v1058
      %1154 = vmatprep.subr.mxu0 0.0
      %1155 = vmatpush2.msra.mxu0 0.0
      %1156 = vmatprep.subr.mxu0 0.0
      %1157 = vmatpush2.msra.mxu0 0.0
      %1158 = vmatprep.subr.mxu0 0.0
      %1159 = vmatpush2.msra.mxu0 0.0
      %1160 = vmatprep.subr.mxu0 0.0
      %1161 = vmatpush2.msra.mxu0 0.0
      %1162 = vmatprep.subr.mxu0 0.0
      %1163 = vmatpush2.msra.mxu0 0.0
      %1164 = vmatprep.subr.mxu0 0.0
      %1165 = vmatpush2.msra.mxu0 0.0
      %1166 = vmatprep.subr.mxu0 0.0
      %1167 = vmatpush2.msra.mxu0 0.0
      %1168 = vmatprep.subr.mxu0 0.0
      %1169 = vmatpush2.msra.mxu0 0.0
      %1170 = vmatprep.subr.mxu0 0.0
      %1171 = vmatpush2.msra.mxu0 0.0
      %1172 = vmatprep.subr.mxu0 0.0
      %1173 = vmatpush2.msra.mxu0 0.0
      %1174 = vmatprep.subr.mxu0 0.0
      %1175 = vmatpush2.msra.mxu0 0.0
      %1176 = vmatprep.subr.mxu0 0.0
      %1177 = vmatpush2.msra.mxu0 0.0
      %1178 = vmatprep.subr.mxu0 0.0
      %1179 = vmatpush2.msra.mxu0 0.0
      %1180 = vmatprep.subr.mxu0 0.0
      %1181 = vmatpush2.msra.mxu0 0.0
      %1182 = vmatprep.subr.mxu0 0.0
      %1183 = vmatpush2.msra.mxu0 0.0
      %1184 = vmatprep.subr.mxu0 0.0
      %1185 = vmatpush2.msra.mxu0 0.0
      %1186 = vmatprep.mubr.f32.mxu0 0.0
      %1187 = vmatmul.mubr.f32.gmra.mxu0 %v1075
      %v1188 = vpop.f32.mrf.mxu0
      %v1189 = vadd.f32 %v1071, %v1188
      %v1190 = vpop.f32.mrf.mxu0
      %1191 = vmatprep.mubr.f32.mxu0 0.0
      %1192 = vmatmul.mubr.f32.gmra.mxu0 %v1078
      %v1193 = vpop.f32.mrf.mxu0
      %v1194 = vadd.f32 %v1071, %v1193
      %v1195 = vpop.f32.mrf.mxu0
      %1196 = vmatprep.mubr.f32.mxu0 0.0
      %1197 = vmatmul.mubr.f32.gmra.mxu0 %v1081
      %v1198 = vpop.f32.mrf.mxu0
      %v1199 = vadd.f32 %v1071, %v1198
      %v1200 = vpop.f32.mrf.mxu0
      %1201 = vmatprep.mubr.f32.mxu0 0.0
      %1202 = vmatmul.mubr.f32.gmra.mxu0 %v1084
      %v1203 = vpop.f32.mrf.mxu0
      %v1204 = vadd.f32 %v1071, %v1203
      %v1205 = vpop.f32.mrf.mxu0
      %1206 = vmatprep.mubr.f32.mxu0 0.0
      %1207 = vmatmul.mubr.f32.gmra.mxu0 %v1087
      %v1208 = vpop.f32.mrf.mxu0
      %v1209 = vadd.f32 %v1071, %v1208
      %v1210 = vpop.f32.mrf.mxu0
      %1211 = vmatprep.mubr.f32.mxu0 0.0
      %1212 = vmatmul.mubr.f32.gmra.mxu0 %v1090
      %v1213 = vpop.f32.mrf.mxu0
      %v1214 = vadd.f32 %v1071, %v1213
      %v1215 = vpop.f32.mrf.mxu0
      %1216 = vmatprep.mubr.f32.mxu0 0.0
      %1217 = vmatmul.mubr.f32.gmra.mxu0 %v1093
      %v1218 = vpop.f32.mrf.mxu0
      %v1219 = vadd.f32 %v1071, %v1218
      %v1220 = vpop.f32.mrf.mxu0
      %1221 = vmatprep.mubr.f32.mxu0 0.0
      %1222 = vmatmul.mubr.f32.gmra.mxu0 %v1096
      %v1223 = vpop.f32.mrf.mxu0
      %v1224 = vadd.f32 %v1071, %v1223
      %v1225 = vpop.f32.mrf.mxu0
      %1226 = vmatprep.mubr.f32.mxu0 0.0
      %1227 = vmatmul.mubr.f32.gmra.mxu0 %v1099
      %v1228 = vpop.f32.mrf.mxu0
      %v1229 = vadd.f32 %v1071, %v1228
      %v1230 = vpop.f32.mrf.mxu0
      %1231 = vmatprep.mubr.f32.mxu0 0.0
      %1232 = vmatmul.mubr.f32.gmra.mxu0 %v1102
      %v1233 = vpop.f32.mrf.mxu0
      %v1234 = vadd.f32 %v1071, %v1233
      %v1235 = vpop.f32.mrf.mxu0
      %1236 = vmatprep.mubr.f32.mxu0 0.0
      %1237 = vmatmul.mubr.f32.gmra.mxu0 %v1105
      %v1238 = vpop.f32.mrf.mxu0
      %v1239 = vadd.f32 %v1071, %v1238
      %v1240 = vpop.f32.mrf.mxu0
      %1241 = vmatprep.mubr.f32.mxu0 0.0
      %1242 = vmatmul.mubr.f32.gmra.mxu0 %v1108
      %v1243 = vpop.f32.mrf.mxu0
      %v1244 = vadd.f32 %v1071, %v1243
      %v1245 = vpop.f32.mrf.mxu0
      %1246 = vmatprep.mubr.f32.mxu0 0.0
      %1247 = vmatmul.mubr.f32.gmra.mxu0 %v1111
      %v1248 = vpop.f32.mrf.mxu0
      %v1249 = vadd.f32 %v1071, %v1248
      %v1250 = vpop.f32.mrf.mxu0
      %1251 = vmatprep.mubr.f32.mxu0 0.0
      %1252 = vmatmul.mubr.f32.gmra.mxu0 %v1114
      %v1253 = vpop.f32.mrf.mxu0
      %v1254 = vadd.f32 %v1071, %v1253
      %v1255 = vpop.f32.mrf.mxu0
      %1256 = vmatprep.mubr.f32.mxu0 0.0
      %1257 = vmatmul.mubr.f32.gmra.mxu0 %v1117
      %v1258 = vpop.f32.mrf.mxu0
      %v1259 = vadd.f32 %v1071, %v1258
      %v1260 = vpop.f32.mrf.mxu0
      %1261 = vmatprep.mubr.f32.mxu0 0.0
      %1262 = vmatmul.mubr.f32.gmra.mxu0 %v1120
      %v1263 = vpop.f32.mrf.mxu0
      %v1264 = vadd.f32 %v1071, %v1263
      %v1265 = vpop.f32.mrf.mxu0
      %1266 = vdwg.mxu0
      %v1267 = vmax.f32 %v1189, 0.0
      %v1268 = vmax.f32 %v1194, 0.0
      %v1269 = vmax.f32 %v1199, 0.0
      %v1270 = vmax.f32 %v1204, 0.0
      %v1271 = vmax.f32 %v1209, 0.0
      %v1272 = vmax.f32 %v1214, 0.0
      %v1273 = vmax.f32 %v1219, 0.0
      %v1274 = vmax.f32 %v1224, 0.0
      %v1275 = vmax.f32 %v1229, 0.0
      %v1276 = vmax.f32 %v1234, 0.0
      %v1277 = vmax.f32 %v1239, 0.0
      %v1278 = vmax.f32 %v1244, 0.0
      %v1279 = vmax.f32 %v1249, 0.0
      %v1280 = vmax.f32 %v1254, 0.0
      %v1281 = vmax.f32 %v1259, 0.0
      %v1282 = vmax.f32 %v1264, 0.0
      %1283 = vrot.lane.b32.xlu0 %v163, 79
      %v1284 = vpop.permute.xlu0 %1283
      %1285 = vrot.lane.b32.xlu0 %v164, 79
      %v1286 = vpop.permute.xlu0 %1285
      %1289 = vrot.lane.b32.xlu0 %v858, 79
      %v1290 = vpop.permute.xlu0 %1289
      %vm1292 = vcmask 130048
      %v1294 = vsel %vm1292, %v1267, 0
      %v1297 = vsel %vm1292, %v1268, 0
      %v1300 = vsel %vm1292, %v1269, 0
      %v1303 = vsel %vm1292, %v1270, 0
      %v1306 = vsel %vm1292, %v1271, 0
      %v1309 = vsel %vm1292, %v1272, 0
      %v1312 = vsel %vm1292, %v1273, 0
      %v1315 = vsel %vm1292, %v1274, 0
      %v1318 = vsel %vm1292, %v1275, 0
      %v1321 = vsel %vm1292, %v1276, 0
      %v1324 = vsel %vm1292, %v1277, 0
      %v1327 = vsel %vm1292, %v1278, 0
      %v1330 = vsel %vm1292, %v1279, 0
      %v1333 = vsel %vm1292, %v1280, 0
      %v1336 = vsel %vm1292, %v1281, 0
      %v1339 = vsel %vm1292, %v1282, 0
      %1341 = vmatprep.subr.mxu0 0.0
      %1342 = vmatpush1.msra.mxu0 0.0
      %1343 = vmatprep.subr.mxu0 0.0
      %1344 = vmatpush1.msra.mxu0 0.0
      %1345 = vmatprep.subr.mxu0 0.0
      %1346 = vmatpush1.msra.mxu0 0.0
      %1347 = vmatprep.subr.mxu0 0.0
      %1348 = vmatpush1.msra.mxu0 0.0
      %1349 = vmatprep.subr.mxu0 0.0
      %1350 = vmatpush1.msra.mxu0 0.0
      %1351 = vmatprep.subr.mxu0 0.0
      %1352 = vmatpush1.msra.mxu0 0.0
      %1353 = vmatprep.subr.mxu0 0.0
      %1354 = vmatpush1.msra.mxu0 0.0
      %1355 = vmatprep.subr.mxu0 0.0
      %1356 = vmatpush1.msra.mxu0 0.0
      %1357 = vmatprep.subr.mxu0 0.0
      %1358 = vmatpush1.msra.mxu0 0.0
      %1359 = vmatprep.subr.mxu0 0.0
      %1360 = vmatpush1.msra.mxu0 0.0
      %1361 = vmatprep.subr.mxu0 0.0
      %1362 = vmatpush1.msra.mxu0 0.0
      %1363 = vmatprep.subr.mxu0 0.0
      %1364 = vmatpush1.msra.mxu0 0.0
      %1365 = vmatprep.subr.mxu0 0.0
      %1366 = vmatpush1.msra.mxu0 0.0
      %1367 = vmatprep.subr.mxu0 0.0
      %1368 = vmatpush1.msra.mxu0 0.0
      %1369 = vmatprep.subr.mxu0 0.0
      %1370 = vmatpush1.msra.mxu0 %v1286
      %1371 = vmatprep.subr.mxu0 0.0
      %1372 = vmatpush1.msra.mxu0 %v1284
      %1373 = vmatprep.subr.mxu0 0.0
      %1374 = vmatpush2.msra.mxu0 0.0
      %1375 = vmatprep.subr.mxu0 0.0
      %1376 = vmatpush2.msra.mxu0 0.0
      %1377 = vmatprep.subr.mxu0 0.0
      %1378 = vmatpush2.msra.mxu0 0.0
      %1379 = vmatprep.subr.mxu0 0.0
      %1380 = vmatpush2.msra.mxu0 0.0
      %1381 = vmatprep.subr.mxu0 0.0
      %1382 = vmatpush2.msra.mxu0 0.0
      %1383 = vmatprep.subr.mxu0 0.0
      %1384 = vmatpush2.msra.mxu0 0.0
      %1385 = vmatprep.subr.mxu0 0.0
      %1386 = vmatpush2.msra.mxu0 0.0
      %1387 = vmatprep.subr.mxu0 0.0
      %1388 = vmatpush2.msra.mxu0 0.0
      %1389 = vmatprep.subr.mxu0 0.0
      %1390 = vmatpush2.msra.mxu0 0.0
      %1391 = vmatprep.subr.mxu0 0.0
      %1392 = vmatpush2.msra.mxu0 0.0
      %1393 = vmatprep.subr.mxu0 0.0
      %1394 = vmatpush2.msra.mxu0 0.0
      %1395 = vmatprep.subr.mxu0 0.0
      %1396 = vmatpush2.msra.mxu0 0.0
      %1397 = vmatprep.subr.mxu0 0.0
      %1398 = vmatpush2.msra.mxu0 0.0
      %1399 = vmatprep.subr.mxu0 0.0
      %1400 = vmatpush2.msra.mxu0 0.0
      %1401 = vmatprep.subr.mxu0 0.0
      %1402 = vmatpush2.msra.mxu0 0.0
      %1403 = vmatprep.subr.mxu0 0.0
      %1404 = vmatpush2.msra.mxu0 0.0
      %1405 = vmatprep.mubr.f32.mxu0 0.0
      %1406 = vmatmul.mubr.f32.gmra.mxu0 %v1294
      %v1407 = vpop.f32.mrf.mxu0
      %v1408 = vadd.f32 %v1290, %v1407
      %v1409 = vpop.f32.mrf.mxu0
      %1410 = vmatprep.mubr.f32.mxu0 0.0
      %1411 = vmatmul.mubr.f32.gmra.mxu0 %v1297
      %v1412 = vpop.f32.mrf.mxu0
      %v1413 = vadd.f32 %v1290, %v1412
      %v1414 = vpop.f32.mrf.mxu0
      %1415 = vmatprep.mubr.f32.mxu0 0.0
      %1416 = vmatmul.mubr.f32.gmra.mxu0 %v1300
      %v1417 = vpop.f32.mrf.mxu0
      %v1418 = vadd.f32 %v1290, %v1417
      %v1419 = vpop.f32.mrf.mxu0
      %1420 = vmatprep.mubr.f32.mxu0 0.0
      %1421 = vmatmul.mubr.f32.gmra.mxu0 %v1303
      %v1422 = vpop.f32.mrf.mxu0
      %v1423 = vadd.f32 %v1290, %v1422
      %v1424 = vpop.f32.mrf.mxu0
      %1425 = vmatprep.mubr.f32.mxu0 0.0
      %1426 = vmatmul.mubr.f32.gmra.mxu0 %v1306
      %v1427 = vpop.f32.mrf.mxu0
      %v1428 = vadd.f32 %v1290, %v1427
      %v1429 = vpop.f32.mrf.mxu0
      %1430 = vmatprep.mubr.f32.mxu0 0.0
      %1431 = vmatmul.mubr.f32.gmra.mxu0 %v1309
      %v1432 = vpop.f32.mrf.mxu0
      %v1433 = vadd.f32 %v1290, %v1432
      %v1434 = vpop.f32.mrf.mxu0
      %1435 = vmatprep.mubr.f32.mxu0 0.0
      %1436 = vmatmul.mubr.f32.gmra.mxu0 %v1312
      %v1437 = vpop.f32.mrf.mxu0
      %v1438 = vadd.f32 %v1290, %v1437
      %v1439 = vpop.f32.mrf.mxu0
      %1440 = vmatprep.mubr.f32.mxu0 0.0
      %1441 = vmatmul.mubr.f32.gmra.mxu0 %v1315
      %v1442 = vpop.f32.mrf.mxu0
      %v1443 = vadd.f32 %v1290, %v1442
      %v1444 = vpop.f32.mrf.mxu0
      %1445 = vmatprep.mubr.f32.mxu0 0.0
      %1446 = vmatmul.mubr.f32.gmra.mxu0 %v1318
      %v1447 = vpop.f32.mrf.mxu0
      %v1448 = vadd.f32 %v1290, %v1447
      %v1449 = vpop.f32.mrf.mxu0
      %1450 = vmatprep.mubr.f32.mxu0 0.0
      %1451 = vmatmul.mubr.f32.gmra.mxu0 %v1321
      %v1452 = vpop.f32.mrf.mxu0
      %v1453 = vadd.f32 %v1290, %v1452
      %v1454 = vpop.f32.mrf.mxu0
      %1455 = vmatprep.mubr.f32.mxu0 0.0
      %1456 = vmatmul.mubr.f32.gmra.mxu0 %v1324
      %v1457 = vpop.f32.mrf.mxu0
      %v1458 = vadd.f32 %v1290, %v1457
      %v1459 = vpop.f32.mrf.mxu0
      %1460 = vmatprep.mubr.f32.mxu0 0.0
      %1461 = vmatmul.mubr.f32.gmra.mxu0 %v1327
      %v1462 = vpop.f32.mrf.mxu0
      %v1463 = vadd.f32 %v1290, %v1462
      %v1464 = vpop.f32.mrf.mxu0
      %1465 = vmatprep.mubr.f32.mxu0 0.0
      %1466 = vmatmul.mubr.f32.gmra.mxu0 %v1330
      %v1467 = vpop.f32.mrf.mxu0
      %v1468 = vadd.f32 %v1290, %v1467
      %v1469 = vpop.f32.mrf.mxu0
      %1470 = vmatprep.mubr.f32.mxu0 0.0
      %1471 = vmatmul.mubr.f32.gmra.mxu0 %v1333
      %v1472 = vpop.f32.mrf.mxu0
      %v1473 = vadd.f32 %v1290, %v1472
      %v1474 = vpop.f32.mrf.mxu0
      %1475 = vmatprep.mubr.f32.mxu0 0.0
      %1476 = vmatmul.mubr.f32.gmra.mxu0 %v1336
      %v1477 = vpop.f32.mrf.mxu0
      %v1478 = vadd.f32 %v1290, %v1477
      %v1479 = vpop.f32.mrf.mxu0
      %1480 = vmatprep.mubr.f32.mxu0 0.0
      %1481 = vmatmul.mubr.f32.gmra.mxu0 %v1339
      %v1482 = vpop.f32.mrf.mxu0
      %v1483 = vadd.f32 %v1290, %v1482
      %v1484 = vpop.f32.mrf.mxu0
      %1485 = vdwg.mxu0
      %1502 = vrot.lane.b32.xlu0 %v959, 120
      %v1503 = vpop.permute.xlu0 %1502
      %1504 = vrot.lane.b32.xlu0 %v964, 120
      %v1505 = vpop.permute.xlu0 %1504
      %1506 = vrot.lane.b32.xlu0 %v969, 120
      %v1507 = vpop.permute.xlu0 %1506
      %1508 = vrot.lane.b32.xlu0 %v974, 120
      %v1509 = vpop.permute.xlu0 %1508
      %1510 = vrot.lane.b32.xlu0 %v979, 120
      %v1511 = vpop.permute.xlu0 %1510
      %1512 = vrot.lane.b32.xlu0 %v984, 120
      %v1513 = vpop.permute.xlu0 %1512
      %1514 = vrot.lane.b32.xlu0 %v989, 120
      %v1515 = vpop.permute.xlu0 %1514
      %1516 = vrot.lane.b32.xlu0 %v994, 120
      %v1517 = vpop.permute.xlu0 %1516
      %1518 = vrot.lane.b32.xlu0 %v999, 120
      %v1519 = vpop.permute.xlu0 %1518
      %1520 = vrot.lane.b32.xlu0 %v1004, 120
      %v1521 = vpop.permute.xlu0 %1520
      %1522 = vrot.lane.b32.xlu0 %v1009, 120
      %v1523 = vpop.permute.xlu0 %1522
      %1524 = vrot.lane.b32.xlu0 %v1014, 120
      %v1525 = vpop.permute.xlu0 %1524
      %1526 = vrot.lane.b32.xlu0 %v1019, 120
      %v1527 = vpop.permute.xlu0 %1526
      %1528 = vrot.lane.b32.xlu0 %v1024, 120
      %v1529 = vpop.permute.xlu0 %1528
      %1530 = vrot.lane.b32.xlu0 %v1029, 120
      %v1531 = vpop.permute.xlu0 %1530
      %1532 = vrot.lane.b32.xlu0 %v1034, 120
      %v1533 = vpop.permute.xlu0 %1532
      %v1550 = vadd.f32 %v147, %v1503
      %v1551 = vadd.f32 %v148, %v1505
      %v1552 = vadd.f32 %v149, %v1507
      %v1553 = vadd.f32 %v150, %v1509
      %v1554 = vadd.f32 %v151, %v1511
      %v1555 = vadd.f32 %v152, %v1513
      %v1556 = vadd.f32 %v153, %v1515
      %v1557 = vadd.f32 %v154, %v1517
      %v1558 = vadd.f32 %v155, %v1519
      %v1559 = vadd.f32 %v156, %v1521
      %v1560 = vadd.f32 %v157, %v1523
      %v1561 = vadd.f32 %v158, %v1525
      %v1562 = vadd.f32 %v159, %v1527
      %v1563 = vadd.f32 %v160, %v1529
      %v1564 = vadd.f32 %v161, %v1531
      %v1565 = vadd.f32 %v162, %v1533
      %1582 = vrot.lane.b32.xlu0 %v777, 24
      %v1583 = vpop.permute.xlu0 %1582
      %1584 = vrot.lane.b32.xlu0 %v782, 24
      %v1585 = vpop.permute.xlu0 %1584
      %1586 = vrot.lane.b32.xlu0 %v787, 24
      %v1587 = vpop.permute.xlu0 %1586
      %1588 = vrot.lane.b32.xlu0 %v792, 24
      %v1589 = vpop.permute.xlu0 %1588
      %1590 = vrot.lane.b32.xlu0 %v797, 24
      %v1591 = vpop.permute.xlu0 %1590
      %1592 = vrot.lane.b32.xlu0 %v802, 24
      %v1593 = vpop.permute.xlu0 %1592
      %1594 = vrot.lane.b32.xlu0 %v807, 24
      %v1595 = vpop.permute.xlu0 %1594
      %1596 = vrot.lane.b32.xlu0 %v812, 24
      %v1597 = vpop.permute.xlu0 %1596
      %1598 = vrot.lane.b32.xlu0 %v817, 24
      %v1599 = vpop.permute.xlu0 %1598
      %1600 = vrot.lane.b32.xlu0 %v822, 24
      %v1601 = vpop.permute.xlu0 %1600
      %1602 = vrot.lane.b32.xlu0 %v827, 24
      %v1603 = vpop.permute.xlu0 %1602
      %1604 = vrot.lane.b32.xlu0 %v832, 24
      %v1605 = vpop.permute.xlu0 %1604
      %1606 = vrot.lane.b32.xlu0 %v837, 24
      %v1607 = vpop.permute.xlu0 %1606
      %1608 = vrot.lane.b32.xlu0 %v842, 24
      %v1609 = vpop.permute.xlu0 %1608
      %1610 = vrot.lane.b32.xlu0 %v847, 24
      %v1611 = vpop.permute.xlu0 %1610
      %1612 = vrot.lane.b32.xlu0 %v852, 24
      %v1613 = vpop.permute.xlu0 %1612
      %v1630 = vadd.f32 %v1550, %v1583
      %v1631 = vadd.f32 %v1551, %v1585
      %v1632 = vadd.f32 %v1552, %v1587
      %v1633 = vadd.f32 %v1553, %v1589
      %v1634 = vadd.f32 %v1554, %v1591
      %v1635 = vadd.f32 %v1555, %v1593
      %v1636 = vadd.f32 %v1556, %v1595
      %v1637 = vadd.f32 %v1557, %v1597
      %v1638 = vadd.f32 %v1558, %v1599
      %v1639 = vadd.f32 %v1559, %v1601
      %v1640 = vadd.f32 %v1560, %v1603
      %v1641 = vadd.f32 %v1561, %v1605
      %v1642 = vadd.f32 %v1562, %v1607
      %v1643 = vadd.f32 %v1563, %v1609
      %v1644 = vadd.f32 %v1564, %v1611
      %v1645 = vadd.f32 %v1565, %v1613
      %1662 = vrot.lane.b32.xlu0 %v1408, 24
      %v1663 = vpop.permute.xlu0 %1662
      %1664 = vrot.lane.b32.xlu0 %v1413, 24
      %v1665 = vpop.permute.xlu0 %1664
      %1666 = vrot.lane.b32.xlu0 %v1418, 24
      %v1667 = vpop.permute.xlu0 %1666
      %1668 = vrot.lane.b32.xlu0 %v1423, 24
      %v1669 = vpop.permute.xlu0 %1668
      %1670 = vrot.lane.b32.xlu0 %v1428, 24
      %v1671 = vpop.permute.xlu0 %1670
      %1672 = vrot.lane.b32.xlu0 %v1433, 24
      %v1673 = vpop.permute.xlu0 %1672
      %1674 = vrot.lane.b32.xlu0 %v1438, 24
      %v1675 = vpop.permute.xlu0 %1674
      %1676 = vrot.lane.b32.xlu0 %v1443, 24
      %v1677 = vpop.permute.xlu0 %1676
      %1678 = vrot.lane.b32.xlu0 %v1448, 24
      %v1679 = vpop.permute.xlu0 %1678
      %1680 = vrot.lane.b32.xlu0 %v1453, 24
      %v1681 = vpop.permute.xlu0 %1680
      %1682 = vrot.lane.b32.xlu0 %v1458, 24
      %v1683 = vpop.permute.xlu0 %1682
      %1684 = vrot.lane.b32.xlu0 %v1463, 24
      %v1685 = vpop.permute.xlu0 %1684
      %1686 = vrot.lane.b32.xlu0 %v1468, 24
      %v1687 = vpop.permute.xlu0 %1686
      %1688 = vrot.lane.b32.xlu0 %v1473, 24
      %v1689 = vpop.permute.xlu0 %1688
      %1690 = vrot.lane.b32.xlu0 %v1478, 24
      %v1691 = vpop.permute.xlu0 %1690
      %1692 = vrot.lane.b32.xlu0 %v1483, 24
      %v1693 = vpop.permute.xlu0 %1692
      %v1710 = vadd.f32 %v1630, %v1663
      %v1711 = vadd.f32 %v1631, %v1665
      %v1712 = vadd.f32 %v1632, %v1667
      %v1713 = vadd.f32 %v1633, %v1669
      %v1714 = vadd.f32 %v1634, %v1671
      %v1715 = vadd.f32 %v1635, %v1673
      %v1716 = vadd.f32 %v1636, %v1675
      %v1717 = vadd.f32 %v1637, %v1677
      %v1718 = vadd.f32 %v1638, %v1679
      %v1719 = vadd.f32 %v1639, %v1681
      %v1720 = vadd.f32 %v1640, %v1683
      %v1721 = vadd.f32 %v1641, %v1685
      %v1722 = vadd.f32 %v1642, %v1687
      %v1723 = vadd.f32 %v1643, %v1689
      %v1724 = vadd.f32 %v1644, %v1691
      %v1725 = vadd.f32 %v1645, %v1693
      %1742 = vrot.lane.b32.xlu0 %v1710, 104
      %v1743 = vpop.permute.xlu0 %1742
      %1744 = vrot.lane.b32.xlu0 %v1711, 104
      %v1745 = vpop.permute.xlu0 %1744
      %1746 = vrot.lane.b32.xlu0 %v1712, 104
      %v1747 = vpop.permute.xlu0 %1746
      %1748 = vrot.lane.b32.xlu0 %v1713, 104
      %v1749 = vpop.permute.xlu0 %1748
      %1750 = vrot.lane.b32.xlu0 %v1714, 104
      %v1751 = vpop.permute.xlu0 %1750
      %1752 = vrot.lane.b32.xlu0 %v1715, 104
      %v1753 = vpop.permute.xlu0 %1752
      %1754 = vrot.lane.b32.xlu0 %v1716, 104
      %v1755 = vpop.permute.xlu0 %1754
      %1756 = vrot.lane.b32.xlu0 %v1717, 104
      %v1757 = vpop.permute.xlu0 %1756
      %1758 = vrot.lane.b32.xlu0 %v1718, 104
      %v1759 = vpop.permute.xlu0 %1758
      %1760 = vrot.lane.b32.xlu0 %v1719, 104
      %v1761 = vpop.permute.xlu0 %1760
      %1762 = vrot.lane.b32.xlu0 %v1720, 104
      %v1763 = vpop.permute.xlu0 %1762
      %1764 = vrot.lane.b32.xlu0 %v1721, 104
      %v1765 = vpop.permute.xlu0 %1764
      %1766 = vrot.lane.b32.xlu0 %v1722, 104
      %v1767 = vpop.permute.xlu0 %1766
      %1768 = vrot.lane.b32.xlu0 %v1723, 104
      %v1769 = vpop.permute.xlu0 %1768
      %1770 = vrot.lane.b32.xlu0 %v1724, 104
      %v1771 = vpop.permute.xlu0 %1770
      %1772 = vrot.lane.b32.xlu0 %v1725, 104
      %v1773 = vpop.permute.xlu0 %1772
      %vm1790 = vcmask 7168
      %1791 = vst.msk [vmem:[%s145] sm:$0xff] %vm1790, %v1743
      %1792 = vst.msk [vmem:[%s145 + $0x8] sm:$0xff] %vm1790, %v1745
      %1793 = vst.msk [vmem:[%s145 + $0x10] sm:$0xff] %vm1790, %v1747
      %1794 = vst.msk [vmem:[%s145 + $0x18] sm:$0xff] %vm1790, %v1749
      %1795 = vst.msk [vmem:[%s145 + $0x20] sm:$0xff] %vm1790, %v1751
      %1796 = vst.msk [vmem:[%s145 + $0x28] sm:$0xff] %vm1790, %v1753
      %1797 = vst.msk [vmem:[%s145 + $0x30] sm:$0xff] %vm1790, %v1755
      %1798 = vst.msk [vmem:[%s145 + $0x38] sm:$0xff] %vm1790, %v1757
      %1799 = vst.msk [vmem:[%s145 + $0x40] sm:$0xff] %vm1790, %v1759
      %1800 = vst.msk [vmem:[%s145 + $0x48] sm:$0xff] %vm1790, %v1761
      %1801 = vst.msk [vmem:[%s145 + $0x50] sm:$0xff] %vm1790, %v1763
      %1802 = vst.msk [vmem:[%s145 + $0x58] sm:$0xff] %vm1790, %v1765
      %1803 = vst.msk [vmem:[%s145 + $0x60] sm:$0xff] %vm1790, %v1767
      %1804 = vst.msk [vmem:[%s145 + $0x68] sm:$0xff] %vm1790, %v1769
      %1805 = vst.msk [vmem:[%s145 + $0x70] sm:$0xff] %vm1790, %v1771
      %1806 = vst.msk [vmem:[%s145 + $0x78] sm:$0xff] %vm1790, %v1773
      %s1807 = smul.u32 16, %s13
      %p1808 = scmp.lt.s32.totalorder %s1807, 31
      %s1809 = scalar_select %p1808, %s1807, 31
      %s1810 = smul.addr %s1809, 8
      %s1811 = scalar_lea.vmem %s2, %s1810
      // Predicated region
      $region29: #{deterministic_decoder.1} parent=27 // pred_check
        %p1812 = pneg %p78
      $region30: #{deterministic_decoder.1} parent=27 // pred_check_branch
        %1814 = sbr.rel (%p1812) target = $region32
      $region31: #{deterministic_decoder.1} parent=27 // pred_region
        %s1815 = smul.u32 16, %s13
      $region32: #{deterministic_decoder.1} parent=27 // pred_fallthru
        _
    $region28: #{deterministic_decoder.1} parent=5 // pred_fallthru
      _
    %p1816 = scmp.le.s32.totalorder 2, %s8
    // Predicated region
    $region33: #{deterministic_decoder.1} parent=5 // pred_check
      %p1817 = pneg %p1816
    $region34: #{deterministic_decoder.1} parent=5 // pred_check_branch
      %1819 = sbr.rel (%p1817) target = $region36
    $region35: #{deterministic_decoder.1} parent=5 // pred_region
      %s1820 = ssub.s32 %s8, 2
      // Predicated region
      $region37: #{deterministic_decoder.1} parent=35 // pred_check
        %p1821 = pneg %p84
      $region38: #{deterministic_decoder.1} parent=35 // pred_check_branch
        %1823 = sbr.rel (%p1821) target = $region40
      $region39: #{deterministic_decoder.1} parent=35 // pred_region
        %s1824 = smul.u32 16, %s14
        %p1825 = scmp.lt.s32.totalorder %s1824, 31
        %s1826 = scalar_select %p1825, %s1824, 31
        %s1827 = smul.addr %s1826, 8
        %s1828 = scalar_lea.vmem %s2, %s1827
      $region40: #{deterministic_decoder.1} parent=35 // pred_fallthru
        _
    $region36: #{deterministic_decoder.1} parent=5 // pred_fallthru
      _
  $region6: #{deterministic_decoder.1} parent=0 // loop_footer
    %s12 = sadd.s32 1, %s8
  $region7: #{deterministic_decoder.1} parent=0 // loop_footer_branch
    %7 = sbr.rel target = $region3
  $region8: #{deterministic_decoder.1} parent=0 // loop_exit
    _

</llo_original>
